<compile_context>
chip_gen: v7x
topology: tpu7x:2x2x1
jax: 0.10.0
libtpu: 0.0.40
codegen_flags: <defaults>
</compile_context>

<pallas_src>
import functools

import jax
import jax.numpy as jnp
from jax import lax
from jax.experimental import pallas as pl
from jax.experimental.pallas import tpu as pltpu

EPS = 1e-6


def _coda_kernel(ut_ref, w_ref, o_ref, *, cc, l_row_pad):
    """One grid step handles `cc` output channels x `tile` pixels.

    ut_ref : [l_row_pad, tile]            bf16 transposed, zero-padded patches
    w_ref  : [cc*l_row_pad, l_row_pad]    bf16 packed weight-predictor chunk
                                          (w_ref[c*l_row_pad + r, m] = W[c, m, r])
    o_ref  : [cc, tile]                   f32 lane-dense output activations
    """
    ut_bf = ut_ref[...]                           # [Lr, T] bf16 (MXU operand)
    ut_f32 = ut_bf.astype(jnp.float32)            # f32 copy for the numerator (hoisted)
    for c in range(cc):                           # static & small: unrolled
        # per-channel matmul; results consumed immediately (no prod round-trip)
        wc = w_ref[c * l_row_pad:(c + 1) * l_row_pad, :]                # [Lr, Lr] bf16
        wdyn = jnp.dot(wc, ut_bf, preferred_element_type=jnp.float32)  # [Lr, T]  f32
        num = jnp.sum(wdyn * ut_f32, axis=0, keepdims=True)            # [1, T]   f32
        ssq = jnp.sum(wdyn * wdyn, axis=0, keepdims=True)              # [1, T]   f32
        # num / sqrt(ssq + eps) == num * rsqrt(ssq + eps)  (EUP slot, ~free)
        o_ref[c:c + 1, :] = num * lax.rsqrt(ssq + EPS)                  # direct row store


def _unfold_lp(x_nchw, k):
    """im2col producing [L, P] directly (pixels on the minor axis).

    Matches torch.nn.functional.unfold ordering: l = c*k*k + kh*k + kw,
    p = b*H*W + y*W + x.  Only the raw input (k^2x smaller than the unfolded
    tensor) is transposed; no [P, L] -> [L, P] HBM transpose is needed.
    """
    b, c_in, h, w = x_nchw.shape
    pad = k // 2
    x_cbhw = jnp.transpose(x_nchw, (1, 0, 2, 3))                  # [C, B, H, W]
    x_p = jnp.pad(x_cbhw, ((0, 0), (0, 0), (pad, pad), (pad, pad)))
    slabs = [x_p[:, :, kh:kh + h, kw:kw + w]
             for kh in range(k) for kw in range(k)]               # each [C, B, H, W]
    u_t = jnp.stack(slabs, axis=1)                                # [C, k*k, B, H, W]
    return u_t.reshape(c_in * k * k, b * h * w)                   # [L, P]


def coda_conv2d(x_nchw, weight, *, kernel_size=3, tile=512, cout_chunk=8):
    """CoDAConv2d forward. x_nchw: [B, C_in, H, W], weight: [C_out, L, L]."""
    b, c_in, h, w = x_nchw.shape
    k = kernel_size
    l_dim = c_in * k * k
    c_out = weight.shape[0]

    # Pad the per-channel feature/contraction dim only to bf16 sublane packing
    # (16), NOT to 128: L=36 -> 48 (zero rows/cols contribute 0 to num & ssq).
    l_row_pad = ((l_dim + 15) // 16) * 16

    assert tile % 128 == 0, "pixel tile must be lane-aligned"
    p_total = b * h * w
    tile = min(tile, ((p_total + 127) // 128) * 128)
    p_pad = pl.cdiv(p_total, tile) * tile          # remainder handled by zero pixels

    cc = min(cout_chunk, c_out)
    if c_out % cc != 0:
        cc = c_out                                 # fall back to a single chunk
    assert cc % 8 == 0 or cc == c_out, "channel chunk must be sublane-aligned"

    # --- glue: unfold in [L, P] order, zero-pad, bf16-cast the matmul operands ---
    u_t = _unfold_lp(x_nchw, k).astype(jnp.float32)                        # [L, P]
    u_t = jnp.pad(u_t, ((0, l_row_pad - l_dim), (0, p_pad - p_total)))     # [Lr, Pp]
    u_t_bf = u_t.astype(jnp.bfloat16)

    # pack the static weight predictor: w_stack[c*Lr + r, m] = weight[c, m, r]
    w_t = jnp.transpose(weight.astype(jnp.float32), (0, 2, 1))             # [C_out, r, m]
    w_t = jnp.pad(w_t, ((0, 0), (0, l_row_pad - l_dim), (0, l_row_pad - l_dim)))
    w_stack = w_t.reshape(c_out * l_row_pad, l_row_pad).astype(jnp.bfloat16)

    # C_out-chunk axis OUTER, pixel axis INNER: the W chunk's block index is
    # constant over the inner loop, so the full W is streamed from HBM once.
    grid = (c_out // cc, p_pad // tile)
    kernel = functools.partial(_coda_kernel, cc=cc, l_row_pad=l_row_pad)
    out_ct = pl.pallas_call(
        kernel,
        out_shape=jax.ShapeDtypeStruct((c_out, p_pad), jnp.float32),
        grid=grid,
        in_specs=[
            # pixel tile (transposed): [Lr, tile]
            pl.BlockSpec((l_row_pad, tile), lambda ci, pi: (0, pi)),
            # packed-W channel chunk: [cc*Lr, Lr]
            pl.BlockSpec((cc * l_row_pad, l_row_pad), lambda ci, pi: (ci, 0)),
        ],
        # lane-dense output block: last dim = tile (multiple of 128)
        out_specs=pl.BlockSpec((cc, tile), lambda ci, pi: (ci, pi)),
        compiler_params=pltpu.CompilerParams(
            dimension_semantics=("parallel", "parallel")),
    )(u_t_bf, w_stack)

    # [C_out, P] -> NCHW (drop the pixel padding)
    out = out_ct[:, :p_total].reshape(c_out, b, h, w).transpose(1, 0, 2, 3)
    return out


def coda_reference(u_t, weight):
    """Pure-JAX reference of the same forward semantics on unfolded input.

    u_t: [L, P], weight: [C_out, L, L] -> [C_out, P]
    """
    wdyn = jnp.einsum('mp,cmr->crp', u_t, weight)        # [C_out, L, P]
    num = jnp.einsum('crp,rp->cp', wdyn, u_t)            # [C_out, P]
    nrm = jnp.sqrt(jnp.sum(wdyn * wdyn, axis=1) + EPS)   # [C_out, P]
    return num / nrm


if __name__ == "__main__":
    B, C_IN, H, W = 2, 4, 16, 16
    K = 3
    C_OUT = 16
    L = C_IN * K * K

    key = jax.random.PRNGKey(0)
    kx, kw = jax.random.split(key)
    x = jax.random.normal(kx, (B, C_IN, H, W), dtype=jnp.float32)
    # deterministic synthetic weight-predictor parameters
    weight = 0.1 * jax.random.normal(kw, (C_OUT, L, L), dtype=jnp.float32)

    # tile=256 / cout_chunk=8 -> a 2x2 grid at this demo size (exercises both
    # axes); tile=512-1024 is the intended size for real workloads.
    out = coda_conv2d(x, weight, kernel_size=K, tile=256, cout_chunk=8)
    out = jax.block_until_ready(out)

    # The kernel runs its matmul in bf16, so validate against the same math on
    # bf16-rounded operands (f32 accumulation) — differences are only ordering.
    u_t = _unfold_lp(x, K).astype(jnp.float32)
    u_bf = u_t.astype(jnp.bfloat16).astype(jnp.float32)
    w_bf = weight.astype(jnp.bfloat16).astype(jnp.float32)
    ref = coda_reference(u_bf, w_bf).reshape(C_OUT, B, H, W).transpose(1, 0, 2, 3)

    assert out.shape == (B, C_OUT, H, W), out.shape
    assert jnp.allclose(out, ref, atol=2e-3, rtol=2e-3), \
        float(jnp.max(jnp.abs(out - ref)))
    print("KERNEL_OK")
</pallas_src>

<mosaic_0001>
module attributes {stable_mosaic.version = 11 : i64} {
  func.func @_coda_kernel(%arg0: i32, %arg1: i32, %arg2: memref<48x256xbf16, #tpu.memory_space<vmem>>, %arg3: memref<384x48xbf16, #tpu.memory_space<vmem>>, %arg4: memref<8x256xf32, #tpu.memory_space<vmem>>) attributes {dimension_semantics = [#tpu.dimension_semantics<parallel>, #tpu.dimension_semantics<parallel>], iteration_bounds = array<i64: 2, 2>, scalar_prefetch = 0 : i64, scratch_operands = 0 : i64, tpu.core_type = #tpu.core_type<tc>, window_params = [{transform_indices = @transform_0, window_bounds = array<i64: 48, 256>}, {transform_indices = @transform_1, window_bounds = array<i64: 384, 48>}, {transform_indices = @transform_2, window_bounds = array<i64: 8, 256>}]} {
    %c0 = arith.constant 0 : index
    %c0_0 = arith.constant 0 : index
    %0 = vector.load %arg2[%c0, %c0_0] : memref<48x256xbf16, #tpu.memory_space<vmem>>, vector<48x256xbf16>
    %1 = arith.extf %0 : vector<48x256xbf16> to vector<48x256xf32>
    %c0_1 = arith.constant 0 : index
    %c0_2 = arith.constant 0 : index
    %2 = vector.load %arg3[%c0_1, %c0_2] : memref<384x48xbf16, #tpu.memory_space<vmem>>, vector<48x48xbf16>
    %cst = arith.constant dense<0.000000e+00> : vector<48x256xf32>
    %3 = tpu.matmul %2, %0, %cst {dimension_numbers = #tpu.dot_dimension_numbers<[1], [0], [0], [1], [0, 0, 1, 1], [], []>} : vector<48x48xbf16>, vector<48x256xbf16>, vector<48x256xf32> -> vector<48x256xf32>
    %4 = arith.mulf %3, %1 : vector<48x256xf32>
    %cst_3 = arith.constant dense<0.000000e+00> : vector<256xf32>
    %5 = vector.multi_reduction <add>, %4, %cst_3 [0] : vector<48x256xf32> to vector<256xf32>
    %6 = vector.shape_cast %5 : vector<256xf32> to vector<1x256xf32>
    %7 = arith.mulf %3, %3 : vector<48x256xf32>
    %cst_4 = arith.constant dense<0.000000e+00> : vector<256xf32>
    %8 = vector.multi_reduction <add>, %7, %cst_4 [0] : vector<48x256xf32> to vector<256xf32>
    %9 = vector.shape_cast %8 : vector<256xf32> to vector<1x256xf32>
    %cst_5 = arith.constant 9.99999997E-7 : f32
    %10 = vector.broadcast %cst_5 : f32 to vector<1x256xf32>
    %11 = arith.addf %9, %10 : vector<1x256xf32>
    %12 = math.rsqrt %11 : vector<1x256xf32>
    %13 = arith.mulf %6, %12 : vector<1x256xf32>
    %c0_6 = arith.constant 0 : index
    %c0_7 = arith.constant 0 : index
    %14 = vector.load %arg4[%c0_6, %c0_7] : memref<8x256xf32, #tpu.memory_space<vmem>>, vector<1x256xf32>
    tpu.vector_store %arg4[%c0_6, %c0_7], %13 {strides = array<i32>} : memref<8x256xf32, #tpu.memory_space<vmem>>, vector<1x256xf32>,
    %c48 = arith.constant 48 : index
    %c0_8 = arith.constant 0 : index
    %15 = vector.load %arg3[%c48, %c0_8] : memref<384x48xbf16, #tpu.memory_space<vmem>>, vector<48x48xbf16>
    %cst_9 = arith.constant dense<0.000000e+00> : vector<48x256xf32>
    %16 = tpu.matmul %15, %0, %cst_9 {dimension_numbers = #tpu.dot_dimension_numbers<[1], [0], [0], [1], [0, 0, 1, 1], [], []>} : vector<48x48xbf16>, vector<48x256xbf16>, vector<48x256xf32> -> vector<48x256xf32>
    %17 = arith.mulf %16, %1 : vector<48x256xf32>
    %cst_10 = arith.constant dense<0.000000e+00> : vector<256xf32>
    %18 = vector.multi_reduction <add>, %17, %cst_10 [0] : vector<48x256xf32> to vector<256xf32>
    %19 = vector.shape_cast %18 : vector<256xf32> to vector<1x256xf32>
    %20 = arith.mulf %16, %16 : vector<48x256xf32>
    %cst_11 = arith.constant dense<0.000000e+00> : vector<256xf32>
    %21 = vector.multi_reduction <add>, %20, %cst_11 [0] : vector<48x256xf32> to vector<256xf32>
    %22 = vector.shape_cast %21 : vector<256xf32> to vector<1x256xf32>
    %cst_12 = arith.constant 9.99999997E-7 : f32
    %23 = vector.broadcast %cst_12 : f32 to vector<1x256xf32>
    %24 = arith.addf %22, %23 : vector<1x256xf32>
    %25 = math.rsqrt %24 : vector<1x256xf32>
    %26 = arith.mulf %19, %25 : vector<1x256xf32>
    %c1 = arith.constant 1 : index
    %c0_13 = arith.constant 0 : index
    %27 = vector.load %arg4[%c1, %c0_13] : memref<8x256xf32, #tpu.memory_space<vmem>>, vector<1x256xf32>
    tpu.vector_store %arg4[%c1, %c0_13], %26 {strides = array<i32>} : memref<8x256xf32, #tpu.memory_space<vmem>>, vector<1x256xf32>,
    %c96 = arith.constant 96 : index
    %c0_14 = arith.constant 0 : index
    %28 = vector.load %arg3[%c96, %c0_14] : memref<384x48xbf16, #tpu.memory_space<vmem>>, vector<48x48xbf16>
    %cst_15 = arith.constant dense<0.000000e+00> : vector<48x256xf32>
    %29 = tpu.matmul %28, %0, %cst_15 {dimension_numbers = #tpu.dot_dimension_numbers<[1], [0], [0], [1], [0, 0, 1, 1], [], []>} : vector<48x48xbf16>, vector<48x256xbf16>, vector<48x256xf32> -> vector<48x256xf32>
    %30 = arith.mulf %29, %1 : vector<48x256xf32>
    %cst_16 = arith.constant dense<0.000000e+00> : vector<256xf32>
    %31 = vector.multi_reduction <add>, %30, %cst_16 [0] : vector<48x256xf32> to vector<256xf32>
    %32 = vector.shape_cast %31 : vector<256xf32> to vector<1x256xf32>
    %33 = arith.mulf %29, %29 : vector<48x256xf32>
    %cst_17 = arith.constant dense<0.000000e+00> : vector<256xf32>
    %34 = vector.multi_reduction <add>, %33, %cst_17 [0] : vector<48x256xf32> to vector<256xf32>
    %35 = vector.shape_cast %34 : vector<256xf32> to vector<1x256xf32>
    %cst_18 = arith.constant 9.99999997E-7 : f32
    %36 = vector.broadcast %cst_18 : f32 to vector<1x256xf32>
    %37 = arith.addf %35, %36 : vector<1x256xf32>
    %38 = math.rsqrt %37 : vector<1x256xf32>
    %39 = arith.mulf %32, %38 : vector<1x256xf32>
    %c2 = arith.constant 2 : index
    %c0_19 = arith.constant 0 : index
    %40 = vector.load %arg4[%c2, %c0_19] : memref<8x256xf32, #tpu.memory_space<vmem>>, vector<1x256xf32>
    tpu.vector_store %arg4[%c2, %c0_19], %39 {strides = array<i32>} : memref<8x256xf32, #tpu.memory_space<vmem>>, vector<1x256xf32>,
    %c144 = arith.constant 144 : index
    %c0_20 = arith.constant 0 : index
    %41 = vector.load %arg3[%c144, %c0_20] : memref<384x48xbf16, #tpu.memory_space<vmem>>, vector<48x48xbf16>
    %cst_21 = arith.constant dense<0.000000e+00> : vector<48x256xf32>
    %42 = tpu.matmul %41, %0, %cst_21 {dimension_numbers = #tpu.dot_dimension_numbers<[1], [0], [0], [1], [0, 0, 1, 1], [], []>} : vector<48x48xbf16>, vector<48x256xbf16>, vector<48x256xf32> -> vector<48x256xf32>
    %43 = arith.mulf %42, %1 : vector<48x256xf32>
    %cst_22 = arith.constant dense<0.000000e+00> : vector<256xf32>
    %44 = vector.multi_reduction <add>, %43, %cst_22 [0] : vector<48x256xf32> to vector<256xf32>
    %45 = vector.shape_cast %44 : vector<256xf32> to vector<1x256xf32>
    %46 = arith.mulf %42, %42 : vector<48x256xf32>
    %cst_23 = arith.constant dense<0.000000e+00> : vector<256xf32>
    %47 = vector.multi_reduction <add>, %46, %cst_23 [0] : vector<48x256xf32> to vector<256xf32>
    %48 = vector.shape_cast %47 : vector<256xf32> to vector<1x256xf32>
    %cst_24 = arith.constant 9.99999997E-7 : f32
    %49 = vector.broadcast %cst_24 : f32 to vector<1x256xf32>
    %50 = arith.addf %48, %49 : vector<1x256xf32>
    %51 = math.rsqrt %50 : vector<1x256xf32>
    %52 = arith.mulf %45, %51 : vector<1x256xf32>
    %c3 = arith.constant 3 : index
    %c0_25 = arith.constant 0 : index
    %53 = vector.load %arg4[%c3, %c0_25] : memref<8x256xf32, #tpu.memory_space<vmem>>, vector<1x256xf32>
    tpu.vector_store %arg4[%c3, %c0_25], %52 {strides = array<i32>} : memref<8x256xf32, #tpu.memory_space<vmem>>, vector<1x256xf32>,
    %c192 = arith.constant 192 : index
    %c0_26 = arith.constant 0 : index
    %54 = vector.load %arg3[%c192, %c0_26] : memref<384x48xbf16, #tpu.memory_space<vmem>>, vector<48x48xbf16>
    %cst_27 = arith.constant dense<0.000000e+00> : vector<48x256xf32>
    %55 = tpu.matmul %54, %0, %cst_27 {dimension_numbers = #tpu.dot_dimension_numbers<[1], [0], [0], [1], [0, 0, 1, 1], [], []>} : vector<48x48xbf16>, vector<48x256xbf16>, vector<48x256xf32> -> vector<48x256xf32>
    %56 = arith.mulf %55, %1 : vector<48x256xf32>
    %cst_28 = arith.constant dense<0.000000e+00> : vector<256xf32>
    %57 = vector.multi_reduction <add>, %56, %cst_28 [0] : vector<48x256xf32> to vector<256xf32>
    %58 = vector.shape_cast %57 : vector<256xf32> to vector<1x256xf32>
    %59 = arith.mulf %55, %55 : vector<48x256xf32>
    %cst_29 = arith.constant dense<0.000000e+00> : vector<256xf32>
    %60 = vector.multi_reduction <add>, %59, %cst_29 [0] : vector<48x256xf32> to vector<256xf32>
    %61 = vector.shape_cast %60 : vector<256xf32> to vector<1x256xf32>
    %cst_30 = arith.constant 9.99999997E-7 : f32
    %62 = vector.broadcast %cst_30 : f32 to vector<1x256xf32>
    %63 = arith.addf %61, %62 : vector<1x256xf32>
    %64 = math.rsqrt %63 : vector<1x256xf32>
    %65 = arith.mulf %58, %64 : vector<1x256xf32>
    %c4 = arith.constant 4 : index
    %c0_31 = arith.constant 0 : index
    %66 = vector.load %arg4[%c4, %c0_31] : memref<8x256xf32, #tpu.memory_space<vmem>>, vector<1x256xf32>
    tpu.vector_store %arg4[%c4, %c0_31], %65 {strides = array<i32>} : memref<8x256xf32, #tpu.memory_space<vmem>>, vector<1x256xf32>,
    %c240 = arith.constant 240 : index
    %c0_32 = arith.constant 0 : index
    %67 = vector.load %arg3[%c240, %c0_32] : memref<384x48xbf16, #tpu.memory_space<vmem>>, vector<48x48xbf16>
    %cst_33 = arith.constant dense<0.000000e+00> : vector<48x256xf32>
    %68 = tpu.matmul %67, %0, %cst_33 {dimension_numbers = #tpu.dot_dimension_numbers<[1], [0], [0], [1], [0, 0, 1, 1], [], []>} : vector<48x48xbf16>, vector<48x256xbf16>, vector<48x256xf32> -> vector<48x256xf32>
    %69 = arith.mulf %68, %1 : vector<48x256xf32>
    %cst_34 = arith.constant dense<0.000000e+00> : vector<256xf32>
    %70 = vector.multi_reduction <add>, %69, %cst_34 [0] : vector<48x256xf32> to vector<256xf32>
    %71 = vector.shape_cast %70 : vector<256xf32> to vector<1x256xf32>
    %72 = arith.mulf %68, %68 : vector<48x256xf32>
    %cst_35 = arith.constant dense<0.000000e+00> : vector<256xf32>
    %73 = vector.multi_reduction <add>, %72, %cst_35 [0] : vector<48x256xf32> to vector<256xf32>
    %74 = vector.shape_cast %73 : vector<256xf32> to vector<1x256xf32>
    %cst_36 = arith.constant 9.99999997E-7 : f32
    %75 = vector.broadcast %cst_36 : f32 to vector<1x256xf32>
    %76 = arith.addf %74, %75 : vector<1x256xf32>
    %77 = math.rsqrt %76 : vector<1x256xf32>
    %78 = arith.mulf %71, %77 : vector<1x256xf32>
    %c5 = arith.constant 5 : index
    %c0_37 = arith.constant 0 : index
    %79 = vector.load %arg4[%c5, %c0_37] : memref<8x256xf32, #tpu.memory_space<vmem>>, vector<1x256xf32>
    tpu.vector_store %arg4[%c5, %c0_37], %78 {strides = array<i32>} : memref<8x256xf32, #tpu.memory_space<vmem>>, vector<1x256xf32>,
    %c288 = arith.constant 288 : index
    %c0_38 = arith.constant 0 : index
    %80 = vector.load %arg3[%c288, %c0_38] : memref<384x48xbf16, #tpu.memory_space<vmem>>, vector<48x48xbf16>
    %cst_39 = arith.constant dense<0.000000e+00> : vector<48x256xf32>
    %81 = tpu.matmul %80, %0, %cst_39 {dimension_numbers = #tpu.dot_dimension_numbers<[1], [0], [0], [1], [0, 0, 1, 1], [], []>} : vector<48x48xbf16>, vector<48x256xbf16>, vector<48x256xf32> -> vector<48x256xf32>
    %82 = arith.mulf %81, %1 : vector<48x256xf32>
    %cst_40 = arith.constant dense<0.000000e+00> : vector<256xf32>
    %83 = vector.multi_reduction <add>, %82, %cst_40 [0] : vector<48x256xf32> to vector<256xf32>
    %84 = vector.shape_cast %83 : vector<256xf32> to vector<1x256xf32>
    %85 = arith.mulf %81, %81 : vector<48x256xf32>
    %cst_41 = arith.constant dense<0.000000e+00> : vector<256xf32>
    %86 = vector.multi_reduction <add>, %85, %cst_41 [0] : vector<48x256xf32> to vector<256xf32>
    %87 = vector.shape_cast %86 : vector<256xf32> to vector<1x256xf32>
    %cst_42 = arith.constant 9.99999997E-7 : f32
    %88 = vector.broadcast %cst_42 : f32 to vector<1x256xf32>
    %89 = arith.addf %87, %88 : vector<1x256xf32>
    %90 = math.rsqrt %89 : vector<1x256xf32>
    %91 = arith.mulf %84, %90 : vector<1x256xf32>
    %c6 = arith.constant 6 : index
    %c0_43 = arith.constant 0 : index
    %92 = vector.load %arg4[%c6, %c0_43] : memref<8x256xf32, #tpu.memory_space<vmem>>, vector<1x256xf32>
    tpu.vector_store %arg4[%c6, %c0_43], %91 {strides = array<i32>} : memref<8x256xf32, #tpu.memory_space<vmem>>, vector<1x256xf32>,
    %c336 = arith.constant 336 : index
    %c0_44 = arith.constant 0 : index
    %93 = vector.load %arg3[%c336, %c0_44] : memref<384x48xbf16, #tpu.memory_space<vmem>>, vector<48x48xbf16>
    %cst_45 = arith.constant dense<0.000000e+00> : vector<48x256xf32>
    %94 = tpu.matmul %93, %0, %cst_45 {dimension_numbers = #tpu.dot_dimension_numbers<[1], [0], [0], [1], [0, 0, 1, 1], [], []>} : vector<48x48xbf16>, vector<48x256xbf16>, vector<48x256xf32> -> vector<48x256xf32>
    %95 = arith.mulf %94, %1 : vector<48x256xf32>
    %cst_46 = arith.constant dense<0.000000e+00> : vector<256xf32>
    %96 = vector.multi_reduction <add>, %95, %cst_46 [0] : vector<48x256xf32> to vector<256xf32>
    %97 = vector.shape_cast %96 : vector<256xf32> to vector<1x256xf32>
    %98 = arith.mulf %94, %94 : vector<48x256xf32>
    %cst_47 = arith.constant dense<0.000000e+00> : vector<256xf32>
    %99 = vector.multi_reduction <add>, %98, %cst_47 [0] : vector<48x256xf32> to vector<256xf32>
    %100 = vector.shape_cast %99 : vector<256xf32> to vector<1x256xf32>
    %cst_48 = arith.constant 9.99999997E-7 : f32
    %101 = vector.broadcast %cst_48 : f32 to vector<1x256xf32>
    %102 = arith.addf %100, %101 : vector<1x256xf32>
    %103 = math.rsqrt %102 : vector<1x256xf32>
    %104 = arith.mulf %97, %103 : vector<1x256xf32>
    %c7 = arith.constant 7 : index
    %c0_49 = arith.constant 0 : index
    %105 = vector.load %arg4[%c7, %c0_49] : memref<8x256xf32, #tpu.memory_space<vmem>>, vector<1x256xf32>
    tpu.vector_store %arg4[%c7, %c0_49], %104 {strides = array<i32>} : memref<8x256xf32, #tpu.memory_space<vmem>>, vector<1x256xf32>,
    return
  }
  func.func @transform_0(%arg0: i32, %arg1: i32) -> (i32, i32) {
    %c0_i32 = arith.constant 0 : i32
    %c0_i32_0 = arith.constant 0 : i32
    return %c0_i32, %arg1 : i32, i32
  }
  func.func @transform_1(%arg0: i32, %arg1: i32) -> (i32, i32) {
    %c0_i32 = arith.constant 0 : i32
    %c0_i32_0 = arith.constant 0 : i32
    return %arg0, %c0_i32 : i32, i32
  }
  func.func @transform_2(%arg0: i32, %arg1: i32) -> (i32, i32) {
    %c0_i32 = arith.constant 0 : i32
    return %arg0, %arg1 : i32, i32
  }
}

</mosaic_0001>

<llo_original>
// kernel: tpu_custom_call.1
$region0: #{tpu_custom_call.1}
  #allocation0 [shape = 'u32[]', space=smem, size = 0x4, offset = 0x4, fixed_abs, tag = 'smem constant byte address 0x4 - core index']
  #allocation1 [shape = 'u32[144,128]{1,0:T(1,128)}', space=vmem, size = 0x12000, scoped, tag = 'internal scratch']
  %s0 = inlined_call_operand.vmem [shape: bf16[48,512], index: 0, kind: input, shape index: {}]
  %s1 = inlined_call_operand.vmem [shape: bf16[768,48], index: 1, kind: input, shape index: {}]
  %s2 = inlined_call_operand.hbm [shape: f32[16,512], index: 2, kind: output, shape index: {}]
  %s3 = sld [smem:[#allocation0]]
  $region79: #{tpu_custom_call.1} parent=0
    _
  %s5 = ssub.s32 1, %s3
  %s6 = scalar_select 0, %s5, %s3
  $region1: #{tpu_custom_call.1} parent=0
    #allocation2 [shape = 'u8[49152]{0}', space=vmem, size = 0xc000, scoped, tag = 'input window, operand 0']
    #allocation3 [shape = 'u8[16384]{0}', space=vmem, size = 0x4000, scoped, tag = 'output window, operand 0']
    #allocation4 [shape = 's32[2]{0}', space=sflag, size = 0x8, scoped, tag = 'scoped memory for tpu_custom_call.1']
    %7 = vsyncpa [#allocation4], 0
    %s8 = scalar_lea.sflag [#allocation4], 1
    %9 = vsyncpa %s8, 0
    loop: start=0, step=1, limit=6
    $region2: #{tpu_custom_call.1} parent=1 // loop_pre_header
      _
    $region3: #{tpu_custom_call.1} parent=1 // loop_header
      %s11 = sphi 0, %s15
      %p12 = scmp.ge.s32.totalorder %s11, 6
      %s18 = sphi 0, %s30
      %s19 = sphi 0, %s26
      %s20 = sphi 0, %s18
      %s21 = sphi 0, %s19
      %s22 = sphi 0, %s20
      %s23 = sphi 0, %s21
      %s33 = sphi 0, %s35
      %s36 = sphi 0, %s33
      %s37 = sphi 0, %s36
      %s53 = sphi 0, %s37
      %s59 = sphi 0, %s61
      %s62 = sphi 0, %s59
      %s63 = sphi 0, %s62
      %s79 = sphi 0, %s63
      %s87 = sphi 0, %s89
      %s90 = sphi 0, %s87
      %s91 = sphi 0, %s90
      %s107 = sphi 0, %s91
    $region4: #{tpu_custom_call.1} parent=1 // loop_header_branch
      %14 = sbr.rel (%p12) target = $region8
    $region5: #{tpu_custom_call.1} parent=1 // loop_body
      %s16 = ssub.s32 %s11, 1
      %s17 = ssub.s32 %s11, 2
      %s24 = sadd.s32 1, %s19
      %p25 = scmp.ge.s32.totalorder %s24, 2
      %s26 = scalar_select %p25, 0, %s24
      %s27 = sadd.s32 1, %s18
      %s28 = scalar_select %p25, %s27, %s18
      %p29 = scmp.ge.s32.totalorder %s28, 2
      %s30 = scalar_select %p29, 0, %s28
      %s31 = ssub.s32 %s19, %s26
      %p32 = scmp.eq.s32.totalorder %s31, 0
      %s34 = sadd.s32 %s33, 1
      %s35 = scalar_select %p32, %s33, %s34
      %p38 = pneg %p32
      %p39 = scmp.eq.s32.totalorder %s11, 3
      %p40 = por %p38, %p39
      %p41 = scmp.ne.s32.totalorder %s33, %s36
      %p42 = scmp.eq.s32.totalorder %s11, 0
      %p43 = por %p41, %p42
      %p44 = scmp.ne.s32.totalorder %s33, %s36
      %p45 = scmp.eq.s32.totalorder %s16, 3
      %p46 = por %p44, %p45
      %p47 = scmp.ne.s32.totalorder %s36, %s37
      %p48 = scmp.eq.s32.totalorder %s16, 0
      %p49 = por %p47, %p48
      %p50 = scmp.ne.s32.totalorder %s36, %s37
      %p51 = scmp.eq.s32.totalorder %s17, 3
      %p52 = por %p50, %p51
      %p54 = scmp.ne.s32.totalorder %s37, %s53
      %p55 = scmp.eq.s32.totalorder %s17, 0
      %p56 = por %p54, %p55
      %s57 = ssub.s32 %s18, %s30
      %p58 = scmp.eq.s32.totalorder %s57, 0
      %s60 = sadd.s32 %s59, 1
      %s61 = scalar_select %p58, %s59, %s60
      %p64 = pneg %p58
      %p65 = scmp.eq.s32.totalorder %s11, 3
      %p66 = por %p64, %p65
      %p67 = scmp.ne.s32.totalorder %s59, %s62
      %p68 = scmp.eq.s32.totalorder %s11, 0
      %p69 = por %p67, %p68
      %p70 = scmp.ne.s32.totalorder %s59, %s62
      %p71 = scmp.eq.s32.totalorder %s16, 3
      %p72 = por %p70, %p71
      %p73 = scmp.ne.s32.totalorder %s62, %s63
      %p74 = scmp.eq.s32.totalorder %s16, 0
      %p75 = por %p73, %p74
      %p76 = scmp.ne.s32.totalorder %s62, %s63
      %p77 = scmp.eq.s32.totalorder %s17, 3
      %p78 = por %p76, %p77
      %p80 = scmp.ne.s32.totalorder %s63, %s79
      %p81 = scmp.eq.s32.totalorder %s17, 0
      %p82 = por %p80, %p81
      %s83 = ssub.s32 %s18, %s30
      %s84 = ssub.s32 %s19, %s26
      %s85 = sor.u32 %s83, %s84
      %p86 = scmp.eq.s32.totalorder %s85, 0
      %s88 = sadd.s32 %s87, 1
      %s89 = scalar_select %p86, %s87, %s88
      %p92 = pneg %p86
      %p93 = scmp.eq.s32.totalorder %s11, 3
      %p94 = por %p92, %p93
      %p95 = scmp.ne.s32.totalorder %s87, %s90
      %p96 = scmp.eq.s32.totalorder %s11, 0
      %p97 = por %p95, %p96
      %p98 = scmp.ne.s32.totalorder %s87, %s90
      %p99 = scmp.eq.s32.totalorder %s16, 3
      %p100 = por %p98, %p99
      %p101 = scmp.ne.s32.totalorder %s90, %s91
      %p102 = scmp.eq.s32.totalorder %s16, 0
      %p103 = por %p101, %p102
      %p104 = scmp.ne.s32.totalorder %s90, %s91
      %p105 = scmp.eq.s32.totalorder %s17, 3
      %p106 = por %p104, %p105
      %p108 = scmp.ne.s32.totalorder %s91, %s107
      %p109 = scmp.eq.s32.totalorder %s17, 0
      %p110 = por %p108, %p109
      %p111 = scmp.le.s32.totalorder 1, %s11
      %p112 = scmp.lt.s32.totalorder %s11, 5
      %p113 = pnand %p111, %p112
      %p114 = pneg %p113
      // Predicated region
      $region9: #{tpu_custom_call.1} parent=5 // pred_check
        _
      $region10: #{tpu_custom_call.1} parent=5 // pred_check_branch
        %116 = sbr.rel (%p113) target = $region12
      $region11: #{tpu_custom_call.1} parent=5 // pred_region
        %s117 = ssub.s32 %s11, 1
      $region12: #{tpu_custom_call.1} parent=5 // pred_fallthru
        _
      %p118 = scmp.lt.s32.totalorder %s11, 4
      // Predicated region
      $region13: #{tpu_custom_call.1} parent=5 // pred_check
        %p119 = pneg %p118
      $region14: #{tpu_custom_call.1} parent=5 // pred_check_branch
        %121 = sbr.rel (%p119) target = $region16
      $region15: #{tpu_custom_call.1} parent=5 // pred_region
        // Predicated region
        $region17: #{tpu_custom_call.1} parent=15 // pred_check
          %p122 = pneg %p43
        $region18: #{tpu_custom_call.1} parent=15 // pred_check_branch
          %124 = sbr.rel (%p122) target = $region20
        $region19: #{tpu_custom_call.1} parent=15 // pred_region
          %s125 = sand.u32 %s33, 1
          %s126 = sand.u32 %s33, 1
          %s127 = smul.addr %s126, 48
          %s128 = scalar_lea.vmem [#allocation2], %s127
          %s129 = smul.u32 2, %s19
          %s130 = smul.addr %s129, 4
          %s131 = scalar_lea.vmem %s0, %s130
          // Predicated region
          $region21: #{tpu_custom_call.1} parent=19 // pred_check
            _
          $region22: #{tpu_custom_call.1} parent=19 // pred_check_branch
            %133 = sbr.rel (0) target = $region24
          $region23: #{tpu_custom_call.1} parent=19 // pred_region
            // Predicated region
            $region25: #{tpu_custom_call.1} parent=23 // pred_check
              _
            $region26: #{tpu_custom_call.1} parent=23 // pred_check_branch
              %135 = sbr.rel (0) target = $region28
            $region27: #{tpu_custom_call.1} parent=23 // pred_region
              // Predicated region
              $region40: #{tpu_custom_call.1} parent=27 // pred_check
                _
              $region41: #{tpu_custom_call.1} parent=27 // pred_check_branch
                %160 = sbr.rel (0) target = $region43
              $region42: #{tpu_custom_call.1} parent=27 // pred_region
                loop: start=0, step=1, limit=1
                $region44: #{tpu_custom_call.1} parent=42 // loop_pre_header
                  _
                $region45: #{tpu_custom_call.1} parent=42 // loop_header
                  %s162 = sphi 0, %s166
                  %p163 = scmp.ge.s32.totalorder %s162, 1
                  %s167 = sphi %s131, %s131
                  %s168 = sphi %s128, %s128
                $region46: #{tpu_custom_call.1} parent=42 // loop_header_branch
                  %165 = sbr.rel (%p163) target = $region50
                $region47: #{tpu_custom_call.1} parent=42 // loop_body
                  %v169 = vld [vmem:[%s167] sm:$0xff]
                  %170 = vst [vmem:[%s168] sm:$0xff] %v169
                  %v171 = vld [vmem:[%s167 + $0x10] sm:$0xff]
                  %172 = vst [vmem:[%s168 + $0x8] sm:$0xff] %v171
                  %v173 = vld [vmem:[%s167 + $0x20] sm:$0xff]
                  %174 = vst [vmem:[%s168 + $0x10] sm:$0xff] %v173
                  %v175 = vld [vmem:[%s167 + $0x30] sm:$0xff]
                  %176 = vst [vmem:[%s168 + $0x18] sm:$0xff] %v175
                  %v177 = vld [vmem:[%s167 + $0x40] sm:$0xff]
                  %178 = vst [vmem:[%s168 + $0x20] sm:$0xff] %v177
                  %v179 = vld [vmem:[%s167 + $0x50] sm:$0xff]
                  %180 = vst [vmem:[%s168 + $0x28] sm:$0xff] %v179
                $region48: #{tpu_custom_call.1} parent=42 // loop_footer
                  %s166 = sadd.s32 1, %s162
                $region49: #{tpu_custom_call.1} parent=42 // loop_footer_branch
                  %161 = sbr.rel target = $region45
                $region50: #{tpu_custom_call.1} parent=42 // loop_exit
                  _
              $region43: #{tpu_custom_call.1} parent=27 // pred_fallthru
                _
              // Predicated region
              $region51: #{tpu_custom_call.1} parent=27 // pred_check
                _
              $region52: #{tpu_custom_call.1} parent=27 // pred_check_branch
                %182 = sbr.rel target = $region54
              $region53: #{tpu_custom_call.1} parent=27 // pred_region
                _
              $region54: #{tpu_custom_call.1} parent=27 // pred_fallthru
                _
            $region28: #{tpu_custom_call.1} parent=23 // pred_fallthru
              _
            // Predicated region
            $region29: #{tpu_custom_call.1} parent=23 // pred_check
              _
            $region30: #{tpu_custom_call.1} parent=23 // pred_check_branch
              %137 = sbr.rel target = $region32
            $region31: #{tpu_custom_call.1} parent=23 // pred_region
              loop: start=0, step=1, limit=1
              $region33: #{tpu_custom_call.1} parent=31 // loop_pre_header
                _
              $region34: #{tpu_custom_call.1} parent=31 // loop_header
                %s140 = sphi 0, %s144
                %p141 = scmp.ge.s32.totalorder %s140, 1
                %s145 = sphi %s131, %s131
                %s146 = sphi %s128, %s128
              $region35: #{tpu_custom_call.1} parent=31 // loop_header_branch
                %143 = sbr.rel (%p141) target = $region39
              $region36: #{tpu_custom_call.1} parent=31 // loop_body
                %v147 = vld [vmem:[%s145] sm:$0xff]
                %148 = vst [vmem:[%s146] sm:$0xff] %v147
                %v149 = vld [vmem:[%s145 + $0x10] sm:$0xff]
                %150 = vst [vmem:[%s146 + $0x8] sm:$0xff] %v149
                %v151 = vld [vmem:[%s145 + $0x20] sm:$0xff]
                %152 = vst [vmem:[%s146 + $0x10] sm:$0xff] %v151
                %v153 = vld [vmem:[%s145 + $0x30] sm:$0xff]
                %154 = vst [vmem:[%s146 + $0x18] sm:$0xff] %v153
                %v155 = vld [vmem:[%s145 + $0x40] sm:$0xff]
                %156 = vst [vmem:[%s146 + $0x20] sm:$0xff] %v155
                %v157 = vld [vmem:[%s145 + $0x50] sm:$0xff]
                %158 = vst [vmem:[%s146 + $0x28] sm:$0xff] %v157
              $region37: #{tpu_custom_call.1} parent=31 // loop_footer
                %s144 = sadd.s32 1, %s140
              $region38: #{tpu_custom_call.1} parent=31 // loop_footer_branch
                %139 = sbr.rel target = $region34
              $region39: #{tpu_custom_call.1} parent=31 // loop_exit
                _
            $region32: #{tpu_custom_call.1} parent=23 // pred_fallthru
              _
          $region24: #{tpu_custom_call.1} parent=19 // pred_fallthru
            _
          %183 = vnop
        $region20: #{tpu_custom_call.1} parent=15 // pred_fallthru
          _
        // Predicated region
        $region55: #{tpu_custom_call.1} parent=15 // pred_check
          %p184 = pneg %p69
        $region56: #{tpu_custom_call.1} parent=15 // pred_check_branch
          %186 = sbr.rel (%p184) target = $region58
        $region57: #{tpu_custom_call.1} parent=15 // pred_region
          %s187 = smul.u32 48, %s18
          %p188 = scmp.lt.s32.totalorder %s187, 95
          %s189 = scalar_select %p188, %s187, 95
          %s190 = smul.addr %s189, 4
          %s191 = scalar_lea.vmem %s1, %s190
          %s192 = smul.u32 48, %s18
        $region58: #{tpu_custom_call.1} parent=15 // pred_fallthru
          _
      $region16: #{tpu_custom_call.1} parent=5 // pred_fallthru
        _
      %p193 = scmp.le.s32.totalorder 1, %s11
      %p194 = scmp.lt.s32.totalorder %s11, 5
      %p195 = pnand %p193, %p194
      %p196 = pneg %p195
      // Predicated region
      $region59: #{tpu_custom_call.1} parent=5 // pred_check
        _
      $region60: #{tpu_custom_call.1} parent=5 // pred_check_branch
        %198 = sbr.rel (%p195) target = $region62
      $region61: #{tpu_custom_call.1} parent=5 // pred_region
        %s199 = ssub.s32 %s11, 1
        %s200 = sand.u32 %s36, 1
        %s201 = sand.u32 %s36, 1
        %s202 = smul.addr %s201, 48
        %s203 = scalar_lea.vmem [#allocation2], %s202
        // Predicated region
        $region63: #{tpu_custom_call.1} parent=61 // pred_check
          %p204 = pneg %p49
        $region64: #{tpu_custom_call.1} parent=61 // pred_check_branch
          %206 = sbr.rel (%p204) target = $region66
        $region65: #{tpu_custom_call.1} parent=61 // pred_region
          _
        $region66: #{tpu_custom_call.1} parent=61 // pred_fallthru
          _
        %s207 = sand.u32 %s36, 1
        %s208 = sand.u32 %s36, 1
        %s209 = smul.addr %s208, 48
        %s210 = scalar_lea.vmem [#allocation2], %s209
        %p211 = pneg %p49
        %p212 = pneg %p46
        %s213 = smul.u32 48, %s20
        %p214 = scmp.lt.s32.totalorder %s213, 95
        %s215 = scalar_select %p214, %s213, 95
        %s216 = smul.addr %s215, 4
        %s217 = scalar_lea.vmem %s1, %s216
        %p218 = pneg %p75
        %p219 = pneg %p72
        %p220 = pneg %p103
        %p221 = pneg %p100
        %s222 = sand.u32 %s90, 1
        %s223 = scalar_lea.sflag [#allocation4], %s222
        %s224 = sand.u32 %s90, 1
        %s225 = smul.addr %s224, 16
        %s226 = scalar_lea.vmem [#allocation3], %s225
        %s227 = smul.u32 2, %s21
        %s228 = smul.u32 48, %s20
        %p229 = scmp.lt.s32.totalorder %s228, 95
        %s230 = scalar_select %p229, %s228, 95
        %s231 = smul.addr %s230, 4
        %s232 = scalar_lea.vmem %s1, %s231
        %s233 = smul.u32 48, %s20
        %s234 = smul.u32 2, %s21
        %v236 = vld [vmem:[%s203] sm:$0xff]
        %v237 = vld [vmem:[%s203 + $0x8] sm:$0xff]
        %v238 = vld [vmem:[%s203 + $0x10] sm:$0xff]
        %v239 = vld [vmem:[%s203 + $0x18] sm:$0xff]
        %v240 = vld [vmem:[%s203 + $0x20] sm:$0xff]
        %v241 = vld [vmem:[%s203 + $0x28] sm:$0xff]
        %v242 = vunpack.c.l.bf16 %v236
        %v243 = vunpack.c.h.bf16 %v236
        %v244 = vunpack.c.l.bf16 %v237
        %v245 = vunpack.c.h.bf16 %v237
        %v246 = vunpack.c.l.bf16 %v238
        %v247 = vunpack.c.h.bf16 %v238
        %v248 = vunpack.c.l.bf16 %v239
        %v249 = vunpack.c.h.bf16 %v239
        %v250 = vunpack.c.l.bf16 %v240
        %v251 = vunpack.c.h.bf16 %v240
        %v252 = vunpack.c.l.bf16 %v241
        %v253 = vunpack.c.h.bf16 %v241
        %v254 = vld [vmem:[%s232] sm:$0xf]
        %v255 = vld [vmem:[%s232 + $0x4] sm:$0xf]
        %v256 = vld [vmem:[%s232 + $0x8] sm:$0xf]
        %v257 = vld [vmem:[%s232 + $0xc] sm:$0xf]
        %v258 = vld [vmem:[%s232 + $0x10] sm:$0xf]
        %v259 = vld [vmem:[%s232 + $0x14] sm:$0xf]
        %v266 = vunpack.c.l.b16 %v254
        %v267 = vunpack.c.l.b16 %v255
        %v268 = vunpack.c.l.b16 %v256
        %v269 = vunpack.c.l.b16 %v257
        %v270 = vunpack.c.l.b16 %v258
        %v271 = vunpack.c.l.b16 %v259
        %v272 = vpack.c.b16 %v267, %v266
        %v273 = vpack.c.b16 %v269, %v268
        %v274 = vpack.c.b16 %v271, %v270
        %v281 = vunpack.c.l.b16 %v236
        %v282 = vunpack.c.h.b16 %v236
        %v283 = vunpack.c.l.b16 %v237
        %v284 = vunpack.c.h.b16 %v237
        %v285 = vunpack.c.l.b16 %v238
        %v286 = vunpack.c.h.b16 %v238
        %v287 = vunpack.c.l.b16 %v239
        %v288 = vunpack.c.h.b16 %v239
        %v289 = vunpack.c.l.b16 %v240
        %v290 = vunpack.c.h.b16 %v240
        %v291 = vunpack.c.l.b16 %v241
        %v292 = vunpack.c.h.b16 %v241
        %v293 = vpack.c.b16 %v283, %v281
        %v294 = vpack.c.b16 %v284, %v282
        %v295 = vpack.c.b16 %v287, %v285
        %v296 = vpack.c.b16 %v288, %v286
        %v297 = vpack.c.b16 %v291, %v289
        %v298 = vpack.c.b16 %v292, %v290
        %vm305 = vcmask 392192
        %v307 = vsel %vm305, %v272, 0
        %v310 = vsel %vm305, %v273, 0
        %v313 = vsel %vm305, %v274, 0
        %315 = vmatprep.subr.bf16.mxu0 %v294
        %316 = vmatpush1.bf16.msra.mxu0 %v293
        %317 = vmatprep.subr.bf16.mxu0 %v296
        %318 = vmatpush1.bf16.msra.mxu0 %v295
        %319 = vmatprep.subr.bf16.mxu0 %v298
        %320 = vmatpush1.bf16.msra.mxu0 %v297
        %321 = vmatprep.subr.bf16.mxu0 0
        %322 = vmatpush1.bf16.msra.mxu0 0
        %323 = vmatprep.subr.bf16.mxu0 0
        %324 = vmatpush1.bf16.msra.mxu0 0
        %325 = vmatprep.subr.bf16.mxu0 0
        %326 = vmatpush1.bf16.msra.mxu0 0
        %327 = vmatprep.subr.bf16.mxu0 0
        %328 = vmatpush1.bf16.msra.mxu0 0
        %329 = vmatprep.subr.bf16.mxu0 0
        %330 = vmatpush1.bf16.msra.mxu0 0
        %331 = vmatprep.subr.bf16.mxu0 0
        %332 = vmatpush1.bf16.msra.mxu0 0
        %333 = vmatprep.subr.bf16.mxu0 0
        %334 = vmatpush1.bf16.msra.mxu0 0
        %335 = vmatprep.subr.bf16.mxu0 0
        %336 = vmatpush1.bf16.msra.mxu0 0
        %337 = vmatprep.subr.bf16.mxu0 0
        %338 = vmatpush1.bf16.msra.mxu0 0
        %339 = vmatprep.subr.bf16.mxu0 0
        %340 = vmatpush1.bf16.msra.mxu0 0
        %341 = vmatprep.subr.bf16.mxu0 0
        %342 = vmatpush1.bf16.msra.mxu0 0
        %343 = vmatprep.subr.bf16.mxu0 0
        %344 = vmatpush1.bf16.msra.mxu0 0
        %345 = vmatprep.subr.bf16.mxu0 0
        %346 = vmatpush1.bf16.msra.mxu0 0
        %347 = vmatprep.mubr.bf16.mxu0 0
        %348 = vmatmul.mubr.bf16.gmra.mrb[0].mxu0 %v307
        %v349 = vpop.f32.mrb[0].mxu0
        %v350 = vadd.f32 0.0, %v349
        %v351 = vpop.f32.mrb[0].mxu0
        %v352 = vadd.f32 0.0, %v351
        %v353 = vpop.f32.mrb[0].mxu0
        %v354 = vadd.f32 0.0, %v353
        %v355 = vpop.f32.mrb[0].mxu0
        %v356 = vadd.f32 0.0, %v355
        %357 = vmatprep.mubr.bf16.mxu0 0
        %358 = vmatmul.mubr.bf16.gmra.mrb[0].mxu0 %v310
        %v359 = vpop.f32.mrb[0].mxu0
        %v360 = vadd.f32 0.0, %v359
        %v361 = vpop.f32.mrb[0].mxu0
        %v362 = vadd.f32 0.0, %v361
        %v363 = vpop.f32.mrb[0].mxu0
        %v364 = vadd.f32 0.0, %v363
        %v365 = vpop.f32.mrb[0].mxu0
        %v366 = vadd.f32 0.0, %v365
        %367 = vmatprep.mubr.bf16.mxu0 0
        %368 = vmatmul.mubr.bf16.gmra.mrb[0].mxu0 %v313
        %v369 = vpop.f32.mrb[0].mxu0
        %v370 = vadd.f32 0.0, %v369
        %v371 = vpop.f32.mrb[0].mxu0
        %v372 = vadd.f32 0.0, %v371
        %v373 = vpop.f32.mrb[0].mxu0
        %v374 = vadd.f32 0.0, %v373
        %v375 = vpop.f32.mrb[0].mxu0
        %v376 = vadd.f32 0.0, %v375
        %377 = vdwg.mxu0
        %v378 = vmul.f32 %v350, %v242
        %v379 = vmul.f32 %v352, %v243
        %v380 = vmul.f32 %v354, %v244
        %v381 = vmul.f32 %v356, %v245
        %v382 = vmul.f32 %v360, %v246
        %v383 = vmul.f32 %v362, %v247
        %v384 = vmul.f32 %v364, %v248
        %v385 = vmul.f32 %v366, %v249
        %v386 = vmul.f32 %v370, %v250
        %v387 = vmul.f32 %v372, %v251
        %v388 = vmul.f32 %v374, %v252
        %v389 = vmul.f32 %v376, %v253
        %v390 = vadd.f32 %v378, %v380
        %v391 = vadd.f32 %v390, %v382
        %v392 = vadd.f32 %v391, %v384
        %v393 = vadd.f32 %v392, %v386
        %v394 = vadd.f32 %v393, %v388
        %v395 = vrot.slane %v394, 4
        %v396 = vadd.f32 %v394, %v395
        %v397 = vrot.slane %v396, 2
        %v398 = vadd.f32 %v396, %v397
        %v399 = vrot.slane %v398, 1
        %v400 = vadd.f32 %v398, %v399
        %v401 = vadd.f32 %v379, %v381
        %v402 = vadd.f32 %v401, %v383
        %v403 = vadd.f32 %v402, %v385
        %v404 = vadd.f32 %v403, %v387
        %v405 = vadd.f32 %v404, %v389
        %v406 = vrot.slane %v405, 4
        %v407 = vadd.f32 %v405, %v406
        %v408 = vrot.slane %v407, 2
        %v409 = vadd.f32 %v407, %v408
        %v410 = vrot.slane %v409, 1
        %v411 = vadd.f32 %v409, %v410
        %v412 = vmul.f32 %v350, %v350
        %v413 = vmul.f32 %v352, %v352
        %v414 = vmul.f32 %v354, %v354
        %v415 = vmul.f32 %v356, %v356
        %v416 = vmul.f32 %v360, %v360
        %v417 = vmul.f32 %v362, %v362
        %v418 = vmul.f32 %v364, %v364
        %v419 = vmul.f32 %v366, %v366
        %v420 = vmul.f32 %v370, %v370
        %v421 = vmul.f32 %v372, %v372
        %v422 = vmul.f32 %v374, %v374
        %v423 = vmul.f32 %v376, %v376
        %v424 = vadd.f32 %v412, %v414
        %v425 = vadd.f32 %v424, %v416
        %v426 = vadd.f32 %v425, %v418
        %v427 = vadd.f32 %v426, %v420
        %v428 = vadd.f32 %v427, %v422
        %v429 = vrot.slane %v428, 4
        %v430 = vadd.f32 %v428, %v429
        %v431 = vrot.slane %v430, 2
        %v432 = vadd.f32 %v430, %v431
        %v433 = vrot.slane %v432, 1
        %v434 = vadd.f32 %v432, %v433
        %v435 = vadd.f32 %v413, %v415
        %v436 = vadd.f32 %v435, %v417
        %v437 = vadd.f32 %v436, %v419
        %v438 = vadd.f32 %v437, %v421
        %v439 = vadd.f32 %v438, %v423
        %v440 = vrot.slane %v439, 4
        %v441 = vadd.f32 %v439, %v440
        %v442 = vrot.slane %v441, 2
        %v443 = vadd.f32 %v441, %v442
        %v444 = vrot.slane %v443, 1
        %v445 = vadd.f32 %v443, %v444
        %v446 = vadd.f32 %v434, 1e-06
        %v447 = vadd.f32 %v445, 1e-06
        %v448 = vrsqrt.pop %v446
        %v449 = vrsqrt.pop %v447
        %v450 = vmul.f32 %v400, %v448
        %v451 = vmul.f32 %v411, %v449
        %v454 = vcombine.low %v450, %v451
        %v456 = vunpack.c.l.s4 1966171168
        %v457 = vunpack.c.0.s8 %v456
        %v458 = vlaneseq
        %v459 = vshrl.u32 %v458, 7
        %v460 = vsub.s32 %v457, %v459
        %v461 = vrot.slane %v454, %v460
        %v463 = vunpack.c.l.s4 1966171168
        %v464 = vunpack.c.0.s8 %v463
        %v465 = vlaneseq
        %v466 = vshrl.u32 %v465, 7
        %v467 = vsub.s32 %v464, %v466
        %v468 = vrot.slane %v461, %v467
        %v470 = vlaneseq
        %vm471 = vcmp.ge.s32.totalorder %v470, 0
        %vm472 = vcmp.lt.s32.totalorder %v470, 256
        %vm473 = vmand %vm471, %vm472
        %474 = vst.msk [vmem:[%s226] ss:$8 sm:$0x3] %vm473, %v468
        %475 = vst.msk [vmem:[%s226] ss:$8 sm:$0x0] %vm473, %v468
        %v476 = vld [vmem:[%s232 + $0x18] sm:$0xf]
        %v477 = vld [vmem:[%s232 + $0x1c] sm:$0xf]
        %v478 = vld [vmem:[%s232 + $0x20] sm:$0xf]
        %v479 = vld [vmem:[%s232 + $0x24] sm:$0xf]
        %v480 = vld [vmem:[%s232 + $0x28] sm:$0xf]
        %v481 = vld [vmem:[%s232 + $0x2c] sm:$0xf]
        %v488 = vunpack.c.l.b16 %v476
        %v489 = vunpack.c.l.b16 %v477
        %v490 = vunpack.c.l.b16 %v478
        %v491 = vunpack.c.l.b16 %v479
        %v492 = vunpack.c.l.b16 %v480
        %v493 = vunpack.c.l.b16 %v481
        %v494 = vpack.c.b16 %v489, %v488
        %v495 = vpack.c.b16 %v491, %v490
        %v496 = vpack.c.b16 %v493, %v492
        %v498 = vsel %vm305, %v494, 0
        %v501 = vsel %vm305, %v495, 0
        %v504 = vsel %vm305, %v496, 0
        %506 = vmatprep.subr.bf16.mxu0 %v294
        %507 = vmatpush1.bf16.msra.mxu0 %v293
        %508 = vmatprep.subr.bf16.mxu0 %v296
        %509 = vmatpush1.bf16.msra.mxu0 %v295
        %510 = vmatprep.subr.bf16.mxu0 %v298
        %511 = vmatpush1.bf16.msra.mxu0 %v297
        %512 = vmatprep.subr.bf16.mxu0 0
        %513 = vmatpush1.bf16.msra.mxu0 0
        %514 = vmatprep.subr.bf16.mxu0 0
        %515 = vmatpush1.bf16.msra.mxu0 0
        %516 = vmatprep.subr.bf16.mxu0 0
        %517 = vmatpush1.bf16.msra.mxu0 0
        %518 = vmatprep.subr.bf16.mxu0 0
        %519 = vmatpush1.bf16.msra.mxu0 0
        %520 = vmatprep.subr.bf16.mxu0 0
        %521 = vmatpush1.bf16.msra.mxu0 0
        %522 = vmatprep.subr.bf16.mxu0 0
        %523 = vmatpush1.bf16.msra.mxu0 0
        %524 = vmatprep.subr.bf16.mxu0 0
        %525 = vmatpush1.bf16.msra.mxu0 0
        %526 = vmatprep.subr.bf16.mxu0 0
        %527 = vmatpush1.bf16.msra.mxu0 0
        %528 = vmatprep.subr.bf16.mxu0 0
        %529 = vmatpush1.bf16.msra.mxu0 0
        %530 = vmatprep.subr.bf16.mxu0 0
        %531 = vmatpush1.bf16.msra.mxu0 0
        %532 = vmatprep.subr.bf16.mxu0 0
        %533 = vmatpush1.bf16.msra.mxu0 0
        %534 = vmatprep.subr.bf16.mxu0 0
        %535 = vmatpush1.bf16.msra.mxu0 0
        %536 = vmatprep.subr.bf16.mxu0 0
        %537 = vmatpush1.bf16.msra.mxu0 0
        %538 = vmatprep.mubr.bf16.mxu0 0
        %539 = vmatmul.mubr.bf16.gmra.mrb[0].mxu0 %v498
        %v540 = vpop.f32.mrb[0].mxu0
        %v541 = vadd.f32 0.0, %v540
        %v542 = vpop.f32.mrb[0].mxu0
        %v543 = vadd.f32 0.0, %v542
        %v544 = vpop.f32.mrb[0].mxu0
        %v545 = vadd.f32 0.0, %v544
        %v546 = vpop.f32.mrb[0].mxu0
        %v547 = vadd.f32 0.0, %v546
        %548 = vmatprep.mubr.bf16.mxu0 0
        %549 = vmatmul.mubr.bf16.gmra.mrb[0].mxu0 %v501
        %v550 = vpop.f32.mrb[0].mxu0
        %v551 = vadd.f32 0.0, %v550
        %v552 = vpop.f32.mrb[0].mxu0
        %v553 = vadd.f32 0.0, %v552
        %v554 = vpop.f32.mrb[0].mxu0
        %v555 = vadd.f32 0.0, %v554
        %v556 = vpop.f32.mrb[0].mxu0
        %v557 = vadd.f32 0.0, %v556
        %558 = vmatprep.mubr.bf16.mxu0 0
        %559 = vmatmul.mubr.bf16.gmra.mrb[0].mxu0 %v504
        %v560 = vpop.f32.mrb[0].mxu0
        %v561 = vadd.f32 0.0, %v560
        %v562 = vpop.f32.mrb[0].mxu0
        %v563 = vadd.f32 0.0, %v562
        %v564 = vpop.f32.mrb[0].mxu0
        %v565 = vadd.f32 0.0, %v564
        %v566 = vpop.f32.mrb[0].mxu0
        %v567 = vadd.f32 0.0, %v566
        %568 = vdwg.mxu0
        %v569 = vmul.f32 %v541, %v242
        %v570 = vmul.f32 %v543, %v243
        %v571 = vmul.f32 %v545, %v244
        %v572 = vmul.f32 %v547, %v245
        %v573 = vmul.f32 %v551, %v246
        %v574 = vmul.f32 %v553, %v247
        %v575 = vmul.f32 %v555, %v248
        %v576 = vmul.f32 %v557, %v249
        %v577 = vmul.f32 %v561, %v250
        %v578 = vmul.f32 %v563, %v251
        %v579 = vmul.f32 %v565, %v252
        %v580 = vmul.f32 %v567, %v253
        %v581 = vadd.f32 %v569, %v571
        %v582 = vadd.f32 %v581, %v573
        %v583 = vadd.f32 %v582, %v575
        %v584 = vadd.f32 %v583, %v577
        %v585 = vadd.f32 %v584, %v579
        %v586 = vrot.slane %v585, 4
        %v587 = vadd.f32 %v585, %v586
        %v588 = vrot.slane %v587, 2
        %v589 = vadd.f32 %v587, %v588
        %v590 = vrot.slane %v589, 1
        %v591 = vadd.f32 %v589, %v590
        %v592 = vadd.f32 %v570, %v572
        %v593 = vadd.f32 %v592, %v574
        %v594 = vadd.f32 %v593, %v576
        %v595 = vadd.f32 %v594, %v578
        %v596 = vadd.f32 %v595, %v580
        %v597 = vrot.slane %v596, 4
        %v598 = vadd.f32 %v596, %v597
        %v599 = vrot.slane %v598, 2
        %v600 = vadd.f32 %v598, %v599
        %v601 = vrot.slane %v600, 1
        %v602 = vadd.f32 %v600, %v601
        %v603 = vmul.f32 %v541, %v541
        %v604 = vmul.f32 %v543, %v543
        %v605 = vmul.f32 %v545, %v545
        %v606 = vmul.f32 %v547, %v547
        %v607 = vmul.f32 %v551, %v551
        %v608 = vmul.f32 %v553, %v553
        %v609 = vmul.f32 %v555, %v555
        %v610 = vmul.f32 %v557, %v557
        %v611 = vmul.f32 %v561, %v561
        %v612 = vmul.f32 %v563, %v563
        %v613 = vmul.f32 %v565, %v565
        %v614 = vmul.f32 %v567, %v567
        %v615 = vadd.f32 %v603, %v605
        %v616 = vadd.f32 %v615, %v607
        %v617 = vadd.f32 %v616, %v609
        %v618 = vadd.f32 %v617, %v611
        %v619 = vadd.f32 %v618, %v613
        %v620 = vrot.slane %v619, 4
        %v621 = vadd.f32 %v619, %v620
        %v622 = vrot.slane %v621, 2
        %v623 = vadd.f32 %v621, %v622
        %v624 = vrot.slane %v623, 1
        %v625 = vadd.f32 %v623, %v624
        %v626 = vadd.f32 %v604, %v606
        %v627 = vadd.f32 %v626, %v608
        %v628 = vadd.f32 %v627, %v610
        %v629 = vadd.f32 %v628, %v612
        %v630 = vadd.f32 %v629, %v614
        %v631 = vrot.slane %v630, 4
        %v632 = vadd.f32 %v630, %v631
        %v633 = vrot.slane %v632, 2
        %v634 = vadd.f32 %v632, %v633
        %v635 = vrot.slane %v634, 1
        %v636 = vadd.f32 %v634, %v635
        %v637 = vadd.f32 %v625, 1e-06
        %v638 = vadd.f32 %v636, 1e-06
        %v639 = vrsqrt.pop %v637
        %v640 = vrsqrt.pop %v638
        %v641 = vmul.f32 %v591, %v639
        %v642 = vmul.f32 %v602, %v640
        %v645 = vcombine.low %v641, %v642
        %v647 = vunpack.c.l.s4 1966171168
        %v648 = vunpack.c.0.s8 %v647
        %v649 = vlaneseq
        %v650 = vshrl.u32 %v649, 7
        %v651 = vsub.s32 %v648, %v650
        %v652 = vrot.slane %v645, %v651
        %v654 = vunpack.c.l.s4 1966171168
        %v655 = vunpack.c.0.s8 %v654
        %v656 = vlaneseq
        %v657 = vshrl.u32 %v656, 7
        %v658 = vsub.s32 %v655, %v657
        %v659 = vrot.slane %v652, %v658
        %s661 = scalar_lea.vmem %s226, 1 [#allocation3]
        %662 = vst.msk [vmem:[%s661] ss:$8 sm:$0x3] %vm473, %v659
        %663 = vst.msk [vmem:[%s661] ss:$8 sm:$0x0] %vm473, %v659
        %v664 = vld [vmem:[%s232 + $0x30] sm:$0xf]
        %v665 = vld [vmem:[%s232 + $0x34] sm:$0xf]
        %v666 = vld [vmem:[%s232 + $0x38] sm:$0xf]
        %v667 = vld [vmem:[%s232 + $0x3c] sm:$0xf]
        %v668 = vld [vmem:[%s232 + $0x40] sm:$0xf]
        %v669 = vld [vmem:[%s232 + $0x44] sm:$0xf]
        %v676 = vunpack.c.l.b16 %v664
        %v677 = vunpack.c.l.b16 %v665
        %v678 = vunpack.c.l.b16 %v666
        %v679 = vunpack.c.l.b16 %v667
        %v680 = vunpack.c.l.b16 %v668
        %v681 = vunpack.c.l.b16 %v669
        %v682 = vpack.c.b16 %v677, %v676
        %v683 = vpack.c.b16 %v679, %v678
        %v684 = vpack.c.b16 %v681, %v680
        %v686 = vsel %vm305, %v682, 0
        %v689 = vsel %vm305, %v683, 0
        %v692 = vsel %vm305, %v684, 0
        %694 = vmatprep.subr.bf16.mxu0 %v294
        %695 = vmatpush1.bf16.msra.mxu0 %v293
        %696 = vmatprep.subr.bf16.mxu0 %v296
        %697 = vmatpush1.bf16.msra.mxu0 %v295
        %698 = vmatprep.subr.bf16.mxu0 %v298
        %699 = vmatpush1.bf16.msra.mxu0 %v297
        %700 = vmatprep.subr.bf16.mxu0 0
        %701 = vmatpush1.bf16.msra.mxu0 0
        %702 = vmatprep.subr.bf16.mxu0 0
        %703 = vmatpush1.bf16.msra.mxu0 0
        %704 = vmatprep.subr.bf16.mxu0 0
        %705 = vmatpush1.bf16.msra.mxu0 0
        %706 = vmatprep.subr.bf16.mxu0 0
        %707 = vmatpush1.bf16.msra.mxu0 0
        %708 = vmatprep.subr.bf16.mxu0 0
        %709 = vmatpush1.bf16.msra.mxu0 0
        %710 = vmatprep.subr.bf16.mxu0 0
        %711 = vmatpush1.bf16.msra.mxu0 0
        %712 = vmatprep.subr.bf16.mxu0 0
        %713 = vmatpush1.bf16.msra.mxu0 0
        %714 = vmatprep.subr.bf16.mxu0 0
        %715 = vmatpush1.bf16.msra.mxu0 0
        %716 = vmatprep.subr.bf16.mxu0 0
        %717 = vmatpush1.bf16.msra.mxu0 0
        %718 = vmatprep.subr.bf16.mxu0 0
        %719 = vmatpush1.bf16.msra.mxu0 0
        %720 = vmatprep.subr.bf16.mxu0 0
        %721 = vmatpush1.bf16.msra.mxu0 0
        %722 = vmatprep.subr.bf16.mxu0 0
        %723 = vmatpush1.bf16.msra.mxu0 0
        %724 = vmatprep.subr.bf16.mxu0 0
        %725 = vmatpush1.bf16.msra.mxu0 0
        %726 = vmatprep.mubr.bf16.mxu0 0
        %727 = vmatmul.mubr.bf16.gmra.mrb[0].mxu0 %v686
        %v728 = vpop.f32.mrb[0].mxu0
        %v729 = vadd.f32 0.0, %v728
        %v730 = vpop.f32.mrb[0].mxu0
        %v731 = vadd.f32 0.0, %v730
        %v732 = vpop.f32.mrb[0].mxu0
        %v733 = vadd.f32 0.0, %v732
        %v734 = vpop.f32.mrb[0].mxu0
        %v735 = vadd.f32 0.0, %v734
        %736 = vmatprep.mubr.bf16.mxu0 0
        %737 = vmatmul.mubr.bf16.gmra.mrb[0].mxu0 %v689
        %v738 = vpop.f32.mrb[0].mxu0
        %v739 = vadd.f32 0.0, %v738
        %v740 = vpop.f32.mrb[0].mxu0
        %v741 = vadd.f32 0.0, %v740
        %v742 = vpop.f32.mrb[0].mxu0
        %v743 = vadd.f32 0.0, %v742
        %v744 = vpop.f32.mrb[0].mxu0
        %v745 = vadd.f32 0.0, %v744
        %746 = vmatprep.mubr.bf16.mxu0 0
        %747 = vmatmul.mubr.bf16.gmra.mrb[0].mxu0 %v692
        %v748 = vpop.f32.mrb[0].mxu0
        %v749 = vadd.f32 0.0, %v748
        %v750 = vpop.f32.mrb[0].mxu0
        %v751 = vadd.f32 0.0, %v750
        %v752 = vpop.f32.mrb[0].mxu0
        %v753 = vadd.f32 0.0, %v752
        %v754 = vpop.f32.mrb[0].mxu0
        %v755 = vadd.f32 0.0, %v754
        %756 = vdwg.mxu0
        %v757 = vmul.f32 %v729, %v242
        %v758 = vmul.f32 %v731, %v243
        %v759 = vmul.f32 %v733, %v244
        %v760 = vmul.f32 %v735, %v245
        %v761 = vmul.f32 %v739, %v246
        %v762 = vmul.f32 %v741, %v247
        %v763 = vmul.f32 %v743, %v248
        %v764 = vmul.f32 %v745, %v249
        %v765 = vmul.f32 %v749, %v250
        %v766 = vmul.f32 %v751, %v251
        %v767 = vmul.f32 %v753, %v252
        %v768 = vmul.f32 %v755, %v253
        %v769 = vadd.f32 %v757, %v759
        %v770 = vadd.f32 %v769, %v761
        %v771 = vadd.f32 %v770, %v763
        %v772 = vadd.f32 %v771, %v765
        %v773 = vadd.f32 %v772, %v767
        %v774 = vrot.slane %v773, 4
        %v775 = vadd.f32 %v773, %v774
        %v776 = vrot.slane %v775, 2
        %v777 = vadd.f32 %v775, %v776
        %v778 = vrot.slane %v777, 1
        %v779 = vadd.f32 %v777, %v778
        %v780 = vadd.f32 %v758, %v760
        %v781 = vadd.f32 %v780, %v762
        %v782 = vadd.f32 %v781, %v764
        %v783 = vadd.f32 %v782, %v766
        %v784 = vadd.f32 %v783, %v768
        %v785 = vrot.slane %v784, 4
        %v786 = vadd.f32 %v784, %v785
        %v787 = vrot.slane %v786, 2
        %v788 = vadd.f32 %v786, %v787
        %v789 = vrot.slane %v788, 1
        %v790 = vadd.f32 %v788, %v789
        %v791 = vmul.f32 %v729, %v729
        %v792 = vmul.f32 %v731, %v731
        %v793 = vmul.f32 %v733, %v733
        %v794 = vmul.f32 %v735, %v735
        %v795 = vmul.f32 %v739, %v739
        %v796 = vmul.f32 %v741, %v741
        %v797 = vmul.f32 %v743, %v743
        %v798 = vmul.f32 %v745, %v745
        %v799 = vmul.f32 %v749, %v749
        %v800 = vmul.f32 %v751, %v751
        %v801 = vmul.f32 %v753, %v753
        %v802 = vmul.f32 %v755, %v755
        %v803 = vadd.f32 %v791, %v793
        %v804 = vadd.f32 %v803, %v795
        %v805 = vadd.f32 %v804, %v797
        %v806 = vadd.f32 %v805, %v799
        %v807 = vadd.f32 %v806, %v801
        %v808 = vrot.slane %v807, 4
        %v809 = vadd.f32 %v807, %v808
        %v810 = vrot.slane %v809, 2
        %v811 = vadd.f32 %v809, %v810
        %v812 = vrot.slane %v811, 1
        %v813 = vadd.f32 %v811, %v812
        %v814 = vadd.f32 %v792, %v794
        %v815 = vadd.f32 %v814, %v796
        %v816 = vadd.f32 %v815, %v798
        %v817 = vadd.f32 %v816, %v800
        %v818 = vadd.f32 %v817, %v802
        %v819 = vrot.slane %v818, 4
        %v820 = vadd.f32 %v818, %v819
        %v821 = vrot.slane %v820, 2
        %v822 = vadd.f32 %v820, %v821
        %v823 = vrot.slane %v822, 1
        %v824 = vadd.f32 %v822, %v823
        %v825 = vadd.f32 %v813, 1e-06
        %v826 = vadd.f32 %v824, 1e-06
        %v827 = vrsqrt.pop %v825
        %v828 = vrsqrt.pop %v826
        %v829 = vmul.f32 %v779, %v827
        %v830 = vmul.f32 %v790, %v828
        %v833 = vcombine.low %v829, %v830
        %v835 = vunpack.c.l.s4 1966171168
        %v836 = vunpack.c.0.s8 %v835
        %v837 = vlaneseq
        %v838 = vshrl.u32 %v837, 7
        %v839 = vsub.s32 %v836, %v838
        %v840 = vrot.slane %v833, %v839
        %v842 = vunpack.c.l.s4 1966171168
        %v843 = vunpack.c.0.s8 %v842
        %v844 = vlaneseq
        %v845 = vshrl.u32 %v844, 7
        %v846 = vsub.s32 %v843, %v845
        %v847 = vrot.slane %v840, %v846
        %s849 = scalar_lea.vmem %s226, 2 [#allocation3]
        %850 = vst.msk [vmem:[%s849] ss:$8 sm:$0x3] %vm473, %v847
        %851 = vst.msk [vmem:[%s849] ss:$8 sm:$0x0] %vm473, %v847
        %v852 = vld [vmem:[%s232 + $0x48] sm:$0xf]
        %v853 = vld [vmem:[%s232 + $0x4c] sm:$0xf]
        %v854 = vld [vmem:[%s232 + $0x50] sm:$0xf]
        %v855 = vld [vmem:[%s232 + $0x54] sm:$0xf]
        %v856 = vld [vmem:[%s232 + $0x58] sm:$0xf]
        %v857 = vld [vmem:[%s232 + $0x5c] sm:$0xf]
        %v864 = vunpack.c.l.b16 %v852
        %v865 = vunpack.c.l.b16 %v853
        %v866 = vunpack.c.l.b16 %v854
        %v867 = vunpack.c.l.b16 %v855
        %v868 = vunpack.c.l.b16 %v856
        %v869 = vunpack.c.l.b16 %v857
        %v870 = vpack.c.b16 %v865, %v864
        %v871 = vpack.c.b16 %v867, %v866
        %v872 = vpack.c.b16 %v869, %v868
        %v874 = vsel %vm305, %v870, 0
        %v877 = vsel %vm305, %v871, 0
        %v880 = vsel %vm305, %v872, 0
        %882 = vmatprep.subr.bf16.mxu0 %v294
        %883 = vmatpush1.bf16.msra.mxu0 %v293
        %884 = vmatprep.subr.bf16.mxu0 %v296
        %885 = vmatpush1.bf16.msra.mxu0 %v295
        %886 = vmatprep.subr.bf16.mxu0 %v298
        %887 = vmatpush1.bf16.msra.mxu0 %v297
        %888 = vmatprep.subr.bf16.mxu0 0
        %889 = vmatpush1.bf16.msra.mxu0 0
        %890 = vmatprep.subr.bf16.mxu0 0
        %891 = vmatpush1.bf16.msra.mxu0 0
        %892 = vmatprep.subr.bf16.mxu0 0
        %893 = vmatpush1.bf16.msra.mxu0 0
        %894 = vmatprep.subr.bf16.mxu0 0
        %895 = vmatpush1.bf16.msra.mxu0 0
        %896 = vmatprep.subr.bf16.mxu0 0
        %897 = vmatpush1.bf16.msra.mxu0 0
        %898 = vmatprep.subr.bf16.mxu0 0
        %899 = vmatpush1.bf16.msra.mxu0 0
        %900 = vmatprep.subr.bf16.mxu0 0
        %901 = vmatpush1.bf16.msra.mxu0 0
        %902 = vmatprep.subr.bf16.mxu0 0
        %903 = vmatpush1.bf16.msra.mxu0 0
        %904 = vmatprep.subr.bf16.mxu0 0
        %905 = vmatpush1.bf16.msra.mxu0 0
        %906 = vmatprep.subr.bf16.mxu0 0
        %907 = vmatpush1.bf16.msra.mxu0 0
        %908 = vmatprep.subr.bf16.mxu0 0
        %909 = vmatpush1.bf16.msra.mxu0 0
        %910 = vmatprep.subr.bf16.mxu0 0
        %911 = vmatpush1.bf16.msra.mxu0 0
        %912 = vmatprep.subr.bf16.mxu0 0
        %913 = vmatpush1.bf16.msra.mxu0 0
        %914 = vmatprep.mubr.bf16.mxu0 0
        %915 = vmatmul.mubr.bf16.gmra.mrb[0].mxu0 %v874
        %v916 = vpop.f32.mrb[0].mxu0
        %v917 = vadd.f32 0.0, %v916
        %v918 = vpop.f32.mrb[0].mxu0
        %v919 = vadd.f32 0.0, %v918
        %v920 = vpop.f32.mrb[0].mxu0
        %v921 = vadd.f32 0.0, %v920
        %v922 = vpop.f32.mrb[0].mxu0
        %v923 = vadd.f32 0.0, %v922
        %924 = vmatprep.mubr.bf16.mxu0 0
        %925 = vmatmul.mubr.bf16.gmra.mrb[0].mxu0 %v877
        %v926 = vpop.f32.mrb[0].mxu0
        %v927 = vadd.f32 0.0, %v926
        %v928 = vpop.f32.mrb[0].mxu0
        %v929 = vadd.f32 0.0, %v928
        %v930 = vpop.f32.mrb[0].mxu0
        %v931 = vadd.f32 0.0, %v930
        %v932 = vpop.f32.mrb[0].mxu0
        %v933 = vadd.f32 0.0, %v932
        %934 = vmatprep.mubr.bf16.mxu0 0
        %935 = vmatmul.mubr.bf16.gmra.mrb[0].mxu0 %v880
        %v936 = vpop.f32.mrb[0].mxu0
        %v937 = vadd.f32 0.0, %v936
        %v938 = vpop.f32.mrb[0].mxu0
        %v939 = vadd.f32 0.0, %v938
        %v940 = vpop.f32.mrb[0].mxu0
        %v941 = vadd.f32 0.0, %v940
        %v942 = vpop.f32.mrb[0].mxu0
        %v943 = vadd.f32 0.0, %v942
        %944 = vdwg.mxu0
        %v945 = vmul.f32 %v917, %v242
        %v946 = vmul.f32 %v919, %v243
        %v947 = vmul.f32 %v921, %v244
        %v948 = vmul.f32 %v923, %v245
        %v949 = vmul.f32 %v927, %v246
        %v950 = vmul.f32 %v929, %v247
        %v951 = vmul.f32 %v931, %v248
        %v952 = vmul.f32 %v933, %v249
        %v953 = vmul.f32 %v937, %v250
        %v954 = vmul.f32 %v939, %v251
        %v955 = vmul.f32 %v941, %v252
        %v956 = vmul.f32 %v943, %v253
        %v957 = vadd.f32 %v945, %v947
        %v958 = vadd.f32 %v957, %v949
        %v959 = vadd.f32 %v958, %v951
        %v960 = vadd.f32 %v959, %v953
        %v961 = vadd.f32 %v960, %v955
        %v962 = vrot.slane %v961, 4
        %v963 = vadd.f32 %v961, %v962
        %v964 = vrot.slane %v963, 2
        %v965 = vadd.f32 %v963, %v964
        %v966 = vrot.slane %v965, 1
        %v967 = vadd.f32 %v965, %v966
        %v968 = vadd.f32 %v946, %v948
        %v969 = vadd.f32 %v968, %v950
        %v970 = vadd.f32 %v969, %v952
        %v971 = vadd.f32 %v970, %v954
        %v972 = vadd.f32 %v971, %v956
        %v973 = vrot.slane %v972, 4
        %v974 = vadd.f32 %v972, %v973
        %v975 = vrot.slane %v974, 2
        %v976 = vadd.f32 %v974, %v975
        %v977 = vrot.slane %v976, 1
        %v978 = vadd.f32 %v976, %v977
        %v979 = vmul.f32 %v917, %v917
        %v980 = vmul.f32 %v919, %v919
        %v981 = vmul.f32 %v921, %v921
        %v982 = vmul.f32 %v923, %v923
        %v983 = vmul.f32 %v927, %v927
        %v984 = vmul.f32 %v929, %v929
        %v985 = vmul.f32 %v931, %v931
        %v986 = vmul.f32 %v933, %v933
        %v987 = vmul.f32 %v937, %v937
        %v988 = vmul.f32 %v939, %v939
        %v989 = vmul.f32 %v941, %v941
        %v990 = vmul.f32 %v943, %v943
        %v991 = vadd.f32 %v979, %v981
        %v992 = vadd.f32 %v991, %v983
        %v993 = vadd.f32 %v992, %v985
        %v994 = vadd.f32 %v993, %v987
        %v995 = vadd.f32 %v994, %v989
        %v996 = vrot.slane %v995, 4
        %v997 = vadd.f32 %v995, %v996
        %v998 = vrot.slane %v997, 2
        %v999 = vadd.f32 %v997, %v998
        %v1000 = vrot.slane %v999, 1
        %v1001 = vadd.f32 %v999, %v1000
        %v1002 = vadd.f32 %v980, %v982
        %v1003 = vadd.f32 %v1002, %v984
        %v1004 = vadd.f32 %v1003, %v986
        %v1005 = vadd.f32 %v1004, %v988
        %v1006 = vadd.f32 %v1005, %v990
        %v1007 = vrot.slane %v1006, 4
        %v1008 = vadd.f32 %v1006, %v1007
        %v1009 = vrot.slane %v1008, 2
        %v1010 = vadd.f32 %v1008, %v1009
        %v1011 = vrot.slane %v1010, 1
        %v1012 = vadd.f32 %v1010, %v1011
        %v1013 = vadd.f32 %v1001, 1e-06
        %v1014 = vadd.f32 %v1012, 1e-06
        %v1015 = vrsqrt.pop %v1013
        %v1016 = vrsqrt.pop %v1014
        %v1017 = vmul.f32 %v967, %v1015
        %v1018 = vmul.f32 %v978, %v1016
        %v1021 = vcombine.low %v1017, %v1018
        %v1023 = vunpack.c.l.s4 1966171168
        %v1024 = vunpack.c.0.s8 %v1023
        %v1025 = vlaneseq
        %v1026 = vshrl.u32 %v1025, 7
        %v1027 = vsub.s32 %v1024, %v1026
        %v1028 = vrot.slane %v1021, %v1027
        %v1030 = vunpack.c.l.s4 1966171168
        %v1031 = vunpack.c.0.s8 %v1030
        %v1032 = vlaneseq
        %v1033 = vshrl.u32 %v1032, 7
        %v1034 = vsub.s32 %v1031, %v1033
        %v1035 = vrot.slane %v1028, %v1034
        %s1037 = scalar_lea.vmem %s226, 3 [#allocation3]
        %1038 = vst.msk [vmem:[%s1037] ss:$8 sm:$0x3] %vm473, %v1035
        %1039 = vst.msk [vmem:[%s1037] ss:$8 sm:$0x0] %vm473, %v1035
        %v1040 = vld [vmem:[%s232 + $0x60] sm:$0xf]
        %v1041 = vld [vmem:[%s232 + $0x64] sm:$0xf]
        %v1042 = vld [vmem:[%s232 + $0x68] sm:$0xf]
        %v1043 = vld [vmem:[%s232 + $0x6c] sm:$0xf]
        %v1044 = vld [vmem:[%s232 + $0x70] sm:$0xf]
        %v1045 = vld [vmem:[%s232 + $0x74] sm:$0xf]
        %v1052 = vunpack.c.l.b16 %v1040
        %v1053 = vunpack.c.l.b16 %v1041
        %v1054 = vunpack.c.l.b16 %v1042
        %v1055 = vunpack.c.l.b16 %v1043
        %v1056 = vunpack.c.l.b16 %v1044
        %v1057 = vunpack.c.l.b16 %v1045
        %v1058 = vpack.c.b16 %v1053, %v1052
        %v1059 = vpack.c.b16 %v1055, %v1054
        %v1060 = vpack.c.b16 %v1057, %v1056
        %v1062 = vsel %vm305, %v1058, 0
        %v1065 = vsel %vm305, %v1059, 0
        %v1068 = vsel %vm305, %v1060, 0
        %1070 = vmatprep.subr.bf16.mxu0 %v294
        %1071 = vmatpush1.bf16.msra.mxu0 %v293
        %1072 = vmatprep.subr.bf16.mxu0 %v296
        %1073 = vmatpush1.bf16.msra.mxu0 %v295
        %1074 = vmatprep.subr.bf16.mxu0 %v298
        %1075 = vmatpush1.bf16.msra.mxu0 %v297
        %1076 = vmatprep.subr.bf16.mxu0 0
        %1077 = vmatpush1.bf16.msra.mxu0 0
        %1078 = vmatprep.subr.bf16.mxu0 0
        %1079 = vmatpush1.bf16.msra.mxu0 0
        %1080 = vmatprep.subr.bf16.mxu0 0
        %1081 = vmatpush1.bf16.msra.mxu0 0
        %1082 = vmatprep.subr.bf16.mxu0 0
        %1083 = vmatpush1.bf16.msra.mxu0 0
        %1084 = vmatprep.subr.bf16.mxu0 0
        %1085 = vmatpush1.bf16.msra.mxu0 0
        %1086 = vmatprep.subr.bf16.mxu0 0
        %1087 = vmatpush1.bf16.msra.mxu0 0
        %1088 = vmatprep.subr.bf16.mxu0 0
        %1089 = vmatpush1.bf16.msra.mxu0 0
        %1090 = vmatprep.subr.bf16.mxu0 0
        %1091 = vmatpush1.bf16.msra.mxu0 0
        %1092 = vmatprep.subr.bf16.mxu0 0
        %1093 = vmatpush1.bf16.msra.mxu0 0
        %1094 = vmatprep.subr.bf16.mxu0 0
        %1095 = vmatpush1.bf16.msra.mxu0 0
        %1096 = vmatprep.subr.bf16.mxu0 0
        %1097 = vmatpush1.bf16.msra.mxu0 0
        %1098 = vmatprep.subr.bf16.mxu0 0
        %1099 = vmatpush1.bf16.msra.mxu0 0
        %1100 = vmatprep.subr.bf16.mxu0 0
        %1101 = vmatpush1.bf16.msra.mxu0 0
        %1102 = vmatprep.mubr.bf16.mxu0 0
        %1103 = vmatmul.mubr.bf16.gmra.mrb[0].mxu0 %v1062
        %v1104 = vpop.f32.mrb[0].mxu0
        %v1105 = vadd.f32 0.0, %v1104
        %v1106 = vpop.f32.mrb[0].mxu0
        %v1107 = vadd.f32 0.0, %v1106
        %v1108 = vpop.f32.mrb[0].mxu0
        %v1109 = vadd.f32 0.0, %v1108
        %v1110 = vpop.f32.mrb[0].mxu0
        %v1111 = vadd.f32 0.0, %v1110
        %1112 = vmatprep.mubr.bf16.mxu0 0
        %1113 = vmatmul.mubr.bf16.gmra.mrb[0].mxu0 %v1065
        %v1114 = vpop.f32.mrb[0].mxu0
        %v1115 = vadd.f32 0.0, %v1114
        %v1116 = vpop.f32.mrb[0].mxu0
        %v1117 = vadd.f32 0.0, %v1116
        %v1118 = vpop.f32.mrb[0].mxu0
        %v1119 = vadd.f32 0.0, %v1118
        %v1120 = vpop.f32.mrb[0].mxu0
        %v1121 = vadd.f32 0.0, %v1120
        %1122 = vmatprep.mubr.bf16.mxu0 0
        %1123 = vmatmul.mubr.bf16.gmra.mrb[0].mxu0 %v1068
        %v1124 = vpop.f32.mrb[0].mxu0
        %v1125 = vadd.f32 0.0, %v1124
        %v1126 = vpop.f32.mrb[0].mxu0
        %v1127 = vadd.f32 0.0, %v1126
        %v1128 = vpop.f32.mrb[0].mxu0
        %v1129 = vadd.f32 0.0, %v1128
        %v1130 = vpop.f32.mrb[0].mxu0
        %v1131 = vadd.f32 0.0, %v1130
        %1132 = vdwg.mxu0
        %v1133 = vmul.f32 %v1105, %v242
        %v1134 = vmul.f32 %v1107, %v243
        %v1135 = vmul.f32 %v1109, %v244
        %v1136 = vmul.f32 %v1111, %v245
        %v1137 = vmul.f32 %v1115, %v246
        %v1138 = vmul.f32 %v1117, %v247
        %v1139 = vmul.f32 %v1119, %v248
        %v1140 = vmul.f32 %v1121, %v249
        %v1141 = vmul.f32 %v1125, %v250
        %v1142 = vmul.f32 %v1127, %v251
        %v1143 = vmul.f32 %v1129, %v252
        %v1144 = vmul.f32 %v1131, %v253
        %v1145 = vadd.f32 %v1133, %v1135
        %v1146 = vadd.f32 %v1145, %v1137
        %v1147 = vadd.f32 %v1146, %v1139
        %v1148 = vadd.f32 %v1147, %v1141
        %v1149 = vadd.f32 %v1148, %v1143
        %v1150 = vrot.slane %v1149, 4
        %v1151 = vadd.f32 %v1149, %v1150
        %v1152 = vrot.slane %v1151, 2
        %v1153 = vadd.f32 %v1151, %v1152
        %v1154 = vrot.slane %v1153, 1
        %v1155 = vadd.f32 %v1153, %v1154
        %v1156 = vadd.f32 %v1134, %v1136
        %v1157 = vadd.f32 %v1156, %v1138
        %v1158 = vadd.f32 %v1157, %v1140
        %v1159 = vadd.f32 %v1158, %v1142
        %v1160 = vadd.f32 %v1159, %v1144
        %v1161 = vrot.slane %v1160, 4
        %v1162 = vadd.f32 %v1160, %v1161
        %v1163 = vrot.slane %v1162, 2
        %v1164 = vadd.f32 %v1162, %v1163
        %v1165 = vrot.slane %v1164, 1
        %v1166 = vadd.f32 %v1164, %v1165
        %v1167 = vmul.f32 %v1105, %v1105
        %v1168 = vmul.f32 %v1107, %v1107
        %v1169 = vmul.f32 %v1109, %v1109
        %v1170 = vmul.f32 %v1111, %v1111
        %v1171 = vmul.f32 %v1115, %v1115
        %v1172 = vmul.f32 %v1117, %v1117
        %v1173 = vmul.f32 %v1119, %v1119
        %v1174 = vmul.f32 %v1121, %v1121
        %v1175 = vmul.f32 %v1125, %v1125
        %v1176 = vmul.f32 %v1127, %v1127
        %v1177 = vmul.f32 %v1129, %v1129
        %v1178 = vmul.f32 %v1131, %v1131
        %v1179 = vadd.f32 %v1167, %v1169
        %v1180 = vadd.f32 %v1179, %v1171
        %v1181 = vadd.f32 %v1180, %v1173
        %v1182 = vadd.f32 %v1181, %v1175
        %v1183 = vadd.f32 %v1182, %v1177
        %v1184 = vrot.slane %v1183, 4
        %v1185 = vadd.f32 %v1183, %v1184
        %v1186 = vrot.slane %v1185, 2
        %v1187 = vadd.f32 %v1185, %v1186
        %v1188 = vrot.slane %v1187, 1
        %v1189 = vadd.f32 %v1187, %v1188
        %v1190 = vadd.f32 %v1168, %v1170
        %v1191 = vadd.f32 %v1190, %v1172
        %v1192 = vadd.f32 %v1191, %v1174
        %v1193 = vadd.f32 %v1192, %v1176
        %v1194 = vadd.f32 %v1193, %v1178
        %v1195 = vrot.slane %v1194, 4
        %v1196 = vadd.f32 %v1194, %v1195
        %v1197 = vrot.slane %v1196, 2
        %v1198 = vadd.f32 %v1196, %v1197
        %v1199 = vrot.slane %v1198, 1
        %v1200 = vadd.f32 %v1198, %v1199
        %v1201 = vadd.f32 %v1189, 1e-06
        %v1202 = vadd.f32 %v1200, 1e-06
        %v1203 = vrsqrt.pop %v1201
        %v1204 = vrsqrt.pop %v1202
        %v1205 = vmul.f32 %v1155, %v1203
        %v1206 = vmul.f32 %v1166, %v1204
        %v1209 = vcombine.low %v1205, %v1206
        %v1211 = vunpack.c.l.s4 1966171168
        %v1212 = vunpack.c.0.s8 %v1211
        %v1213 = vlaneseq
        %v1214 = vshrl.u32 %v1213, 7
        %v1215 = vsub.s32 %v1212, %v1214
        %v1216 = vrot.slane %v1209, %v1215
        %v1218 = vunpack.c.l.s4 1966171168
        %v1219 = vunpack.c.0.s8 %v1218
        %v1220 = vlaneseq
        %v1221 = vshrl.u32 %v1220, 7
        %v1222 = vsub.s32 %v1219, %v1221
        %v1223 = vrot.slane %v1216, %v1222
        %s1225 = scalar_lea.vmem %s226, 4 [#allocation3]
        %1226 = vst.msk [vmem:[%s1225] ss:$8 sm:$0x3] %vm473, %v1223
        %1227 = vst.msk [vmem:[%s1225] ss:$8 sm:$0x0] %vm473, %v1223
        %v1228 = vld [vmem:[%s232 + $0x78] sm:$0xf]
        %v1229 = vld [vmem:[%s232 + $0x7c] sm:$0xf]
        %v1230 = vld [vmem:[%s232 + $0x80] sm:$0xf]
        %v1231 = vld [vmem:[%s232 + $0x84] sm:$0xf]
        %v1232 = vld [vmem:[%s232 + $0x88] sm:$0xf]
        %v1233 = vld [vmem:[%s232 + $0x8c] sm:$0xf]
        %v1240 = vunpack.c.l.b16 %v1228
        %v1241 = vunpack.c.l.b16 %v1229
        %v1242 = vunpack.c.l.b16 %v1230
        %v1243 = vunpack.c.l.b16 %v1231
        %v1244 = vunpack.c.l.b16 %v1232
        %v1245 = vunpack.c.l.b16 %v1233
        %v1246 = vpack.c.b16 %v1241, %v1240
        %v1247 = vpack.c.b16 %v1243, %v1242
        %v1248 = vpack.c.b16 %v1245, %v1244
        %v1250 = vsel %vm305, %v1246, 0
        %v1253 = vsel %vm305, %v1247, 0
        %v1256 = vsel %vm305, %v1248, 0
        %1258 = vmatprep.subr.bf16.mxu0 %v294
        %1259 = vmatpush1.bf16.msra.mxu0 %v293
        %1260 = vmatprep.subr.bf16.mxu0 %v296
        %1261 = vmatpush1.bf16.msra.mxu0 %v295
        %1262 = vmatprep.subr.bf16.mxu0 %v298
        %1263 = vmatpush1.bf16.msra.mxu0 %v297
        %1264 = vmatprep.subr.bf16.mxu0 0
        %1265 = vmatpush1.bf16.msra.mxu0 0
        %1266 = vmatprep.subr.bf16.mxu0 0
        %1267 = vmatpush1.bf16.msra.mxu0 0
        %1268 = vmatprep.subr.bf16.mxu0 0
        %1269 = vmatpush1.bf16.msra.mxu0 0
        %1270 = vmatprep.subr.bf16.mxu0 0
        %1271 = vmatpush1.bf16.msra.mxu0 0
        %1272 = vmatprep.subr.bf16.mxu0 0
        %1273 = vmatpush1.bf16.msra.mxu0 0
        %1274 = vmatprep.subr.bf16.mxu0 0
        %1275 = vmatpush1.bf16.msra.mxu0 0
        %1276 = vmatprep.subr.bf16.mxu0 0
        %1277 = vmatpush1.bf16.msra.mxu0 0
        %1278 = vmatprep.subr.bf16.mxu0 0
        %1279 = vmatpush1.bf16.msra.mxu0 0
        %1280 = vmatprep.subr.bf16.mxu0 0
        %1281 = vmatpush1.bf16.msra.mxu0 0
        %1282 = vmatprep.subr.bf16.mxu0 0
        %1283 = vmatpush1.bf16.msra.mxu0 0
        %1284 = vmatprep.subr.bf16.mxu0 0
        %1285 = vmatpush1.bf16.msra.mxu0 0
        %1286 = vmatprep.subr.bf16.mxu0 0
        %1287 = vmatpush1.bf16.msra.mxu0 0
        %1288 = vmatprep.subr.bf16.mxu0 0
        %1289 = vmatpush1.bf16.msra.mxu0 0
        %1290 = vmatprep.mubr.bf16.mxu0 0
        %1291 = vmatmul.mubr.bf16.gmra.mrb[0].mxu0 %v1250
        %v1292 = vpop.f32.mrb[0].mxu0
        %v1293 = vadd.f32 0.0, %v1292
        %v1294 = vpop.f32.mrb[0].mxu0
        %v1295 = vadd.f32 0.0, %v1294
        %v1296 = vpop.f32.mrb[0].mxu0
        %v1297 = vadd.f32 0.0, %v1296
        %v1298 = vpop.f32.mrb[0].mxu0
        %v1299 = vadd.f32 0.0, %v1298
        %1300 = vmatprep.mubr.bf16.mxu0 0
        %1301 = vmatmul.mubr.bf16.gmra.mrb[0].mxu0 %v1253
        %v1302 = vpop.f32.mrb[0].mxu0
        %v1303 = vadd.f32 0.0, %v1302
        %v1304 = vpop.f32.mrb[0].mxu0
        %v1305 = vadd.f32 0.0, %v1304
        %v1306 = vpop.f32.mrb[0].mxu0
        %v1307 = vadd.f32 0.0, %v1306
        %v1308 = vpop.f32.mrb[0].mxu0
        %v1309 = vadd.f32 0.0, %v1308
        %1310 = vmatprep.mubr.bf16.mxu0 0
        %1311 = vmatmul.mubr.bf16.gmra.mrb[0].mxu0 %v1256
        %v1312 = vpop.f32.mrb[0].mxu0
        %v1313 = vadd.f32 0.0, %v1312
        %v1314 = vpop.f32.mrb[0].mxu0
        %v1315 = vadd.f32 0.0, %v1314
        %v1316 = vpop.f32.mrb[0].mxu0
        %v1317 = vadd.f32 0.0, %v1316
        %v1318 = vpop.f32.mrb[0].mxu0
        %v1319 = vadd.f32 0.0, %v1318
        %1320 = vdwg.mxu0
        %v1321 = vmul.f32 %v1293, %v242
        %v1322 = vmul.f32 %v1295, %v243
        %v1323 = vmul.f32 %v1297, %v244
        %v1324 = vmul.f32 %v1299, %v245
        %v1325 = vmul.f32 %v1303, %v246
        %v1326 = vmul.f32 %v1305, %v247
        %v1327 = vmul.f32 %v1307, %v248
        %v1328 = vmul.f32 %v1309, %v249
        %v1329 = vmul.f32 %v1313, %v250
        %v1330 = vmul.f32 %v1315, %v251
        %v1331 = vmul.f32 %v1317, %v252
        %v1332 = vmul.f32 %v1319, %v253
        %v1333 = vadd.f32 %v1321, %v1323
        %v1334 = vadd.f32 %v1333, %v1325
        %v1335 = vadd.f32 %v1334, %v1327
        %v1336 = vadd.f32 %v1335, %v1329
        %v1337 = vadd.f32 %v1336, %v1331
        %v1338 = vrot.slane %v1337, 4
        %v1339 = vadd.f32 %v1337, %v1338
        %v1340 = vrot.slane %v1339, 2
        %v1341 = vadd.f32 %v1339, %v1340
        %v1342 = vrot.slane %v1341, 1
        %v1343 = vadd.f32 %v1341, %v1342
        %v1344 = vadd.f32 %v1322, %v1324
        %v1345 = vadd.f32 %v1344, %v1326
        %v1346 = vadd.f32 %v1345, %v1328
        %v1347 = vadd.f32 %v1346, %v1330
        %v1348 = vadd.f32 %v1347, %v1332
        %v1349 = vrot.slane %v1348, 4
        %v1350 = vadd.f32 %v1348, %v1349
        %v1351 = vrot.slane %v1350, 2
        %v1352 = vadd.f32 %v1350, %v1351
        %v1353 = vrot.slane %v1352, 1
        %v1354 = vadd.f32 %v1352, %v1353
        %v1355 = vmul.f32 %v1293, %v1293
        %v1356 = vmul.f32 %v1295, %v1295
        %v1357 = vmul.f32 %v1297, %v1297
        %v1358 = vmul.f32 %v1299, %v1299
        %v1359 = vmul.f32 %v1303, %v1303
        %v1360 = vmul.f32 %v1305, %v1305
        %v1361 = vmul.f32 %v1307, %v1307
        %v1362 = vmul.f32 %v1309, %v1309
        %v1363 = vmul.f32 %v1313, %v1313
        %v1364 = vmul.f32 %v1315, %v1315
        %v1365 = vmul.f32 %v1317, %v1317
        %v1366 = vmul.f32 %v1319, %v1319
        %v1367 = vadd.f32 %v1355, %v1357
        %v1368 = vadd.f32 %v1367, %v1359
        %v1369 = vadd.f32 %v1368, %v1361
        %v1370 = vadd.f32 %v1369, %v1363
        %v1371 = vadd.f32 %v1370, %v1365
        %v1372 = vrot.slane %v1371, 4
        %v1373 = vadd.f32 %v1371, %v1372
        %v1374 = vrot.slane %v1373, 2
        %v1375 = vadd.f32 %v1373, %v1374
        %v1376 = vrot.slane %v1375, 1
        %v1377 = vadd.f32 %v1375, %v1376
        %v1378 = vadd.f32 %v1356, %v1358
        %v1379 = vadd.f32 %v1378, %v1360
        %v1380 = vadd.f32 %v1379, %v1362
        %v1381 = vadd.f32 %v1380, %v1364
        %v1382 = vadd.f32 %v1381, %v1366
        %v1383 = vrot.slane %v1382, 4
        %v1384 = vadd.f32 %v1382, %v1383
        %v1385 = vrot.slane %v1384, 2
        %v1386 = vadd.f32 %v1384, %v1385
        %v1387 = vrot.slane %v1386, 1
        %v1388 = vadd.f32 %v1386, %v1387
        %v1389 = vadd.f32 %v1377, 1e-06
        %v1390 = vadd.f32 %v1388, 1e-06
        %v1391 = vrsqrt.pop %v1389
        %v1392 = vrsqrt.pop %v1390
        %v1393 = vmul.f32 %v1343, %v1391
        %v1394 = vmul.f32 %v1354, %v1392
        %v1397 = vcombine.low %v1393, %v1394
        %v1399 = vunpack.c.l.s4 1966171168
        %v1400 = vunpack.c.0.s8 %v1399
        %v1401 = vlaneseq
        %v1402 = vshrl.u32 %v1401, 7
        %v1403 = vsub.s32 %v1400, %v1402
        %v1404 = vrot.slane %v1397, %v1403
        %v1406 = vunpack.c.l.s4 1966171168
        %v1407 = vunpack.c.0.s8 %v1406
        %v1408 = vlaneseq
        %v1409 = vshrl.u32 %v1408, 7
        %v1410 = vsub.s32 %v1407, %v1409
        %v1411 = vrot.slane %v1404, %v1410
        %s1413 = scalar_lea.vmem %s226, 5 [#allocation3]
        %1414 = vst.msk [vmem:[%s1413] ss:$8 sm:$0x3] %vm473, %v1411
        %1415 = vst.msk [vmem:[%s1413] ss:$8 sm:$0x0] %vm473, %v1411
        %v1416 = vld [vmem:[%s232 + $0x90] sm:$0xf]
        %v1417 = vld [vmem:[%s232 + $0x94] sm:$0xf]
        %v1418 = vld [vmem:[%s232 + $0x98] sm:$0xf]
        %v1419 = vld [vmem:[%s232 + $0x9c] sm:$0xf]
        %v1420 = vld [vmem:[%s232 + $0xa0] sm:$0xf]
        %v1421 = vld [vmem:[%s232 + $0xa4] sm:$0xf]
        %v1428 = vunpack.c.l.b16 %v1416
        %v1429 = vunpack.c.l.b16 %v1417
        %v1430 = vunpack.c.l.b16 %v1418
        %v1431 = vunpack.c.l.b16 %v1419
        %v1432 = vunpack.c.l.b16 %v1420
        %v1433 = vunpack.c.l.b16 %v1421
        %v1434 = vpack.c.b16 %v1429, %v1428
        %v1435 = vpack.c.b16 %v1431, %v1430
        %v1436 = vpack.c.b16 %v1433, %v1432
        %v1438 = vsel %vm305, %v1434, 0
        %v1441 = vsel %vm305, %v1435, 0
        %v1444 = vsel %vm305, %v1436, 0
        %1446 = vmatprep.subr.bf16.mxu0 %v294
        %1447 = vmatpush1.bf16.msra.mxu0 %v293
        %1448 = vmatprep.subr.bf16.mxu0 %v296
        %1449 = vmatpush1.bf16.msra.mxu0 %v295
        %1450 = vmatprep.subr.bf16.mxu0 %v298
        %1451 = vmatpush1.bf16.msra.mxu0 %v297
        %1452 = vmatprep.subr.bf16.mxu0 0
        %1453 = vmatpush1.bf16.msra.mxu0 0
        %1454 = vmatprep.subr.bf16.mxu0 0
        %1455 = vmatpush1.bf16.msra.mxu0 0
        %1456 = vmatprep.subr.bf16.mxu0 0
        %1457 = vmatpush1.bf16.msra.mxu0 0
        %1458 = vmatprep.subr.bf16.mxu0 0
        %1459 = vmatpush1.bf16.msra.mxu0 0
        %1460 = vmatprep.subr.bf16.mxu0 0
        %1461 = vmatpush1.bf16.msra.mxu0 0
        %1462 = vmatprep.subr.bf16.mxu0 0
        %1463 = vmatpush1.bf16.msra.mxu0 0
        %1464 = vmatprep.subr.bf16.mxu0 0
        %1465 = vmatpush1.bf16.msra.mxu0 0
        %1466 = vmatprep.subr.bf16.mxu0 0
        %1467 = vmatpush1.bf16.msra.mxu0 0
        %1468 = vmatprep.subr.bf16.mxu0 0
        %1469 = vmatpush1.bf16.msra.mxu0 0
        %1470 = vmatprep.subr.bf16.mxu0 0
        %1471 = vmatpush1.bf16.msra.mxu0 0
        %1472 = vmatprep.subr.bf16.mxu0 0
        %1473 = vmatpush1.bf16.msra.mxu0 0
        %1474 = vmatprep.subr.bf16.mxu0 0
        %1475 = vmatpush1.bf16.msra.mxu0 0
        %1476 = vmatprep.subr.bf16.mxu0 0
        %1477 = vmatpush1.bf16.msra.mxu0 0
        %1478 = vmatprep.mubr.bf16.mxu0 0
        %1479 = vmatmul.mubr.bf16.gmra.mrb[0].mxu0 %v1438
        %v1480 = vpop.f32.mrb[0].mxu0
        %v1481 = vadd.f32 0.0, %v1480
        %v1482 = vpop.f32.mrb[0].mxu0
        %v1483 = vadd.f32 0.0, %v1482
        %v1484 = vpop.f32.mrb[0].mxu0
        %v1485 = vadd.f32 0.0, %v1484
        %v1486 = vpop.f32.mrb[0].mxu0
        %v1487 = vadd.f32 0.0, %v1486
        %1488 = vmatprep.mubr.bf16.mxu0 0
        %1489 = vmatmul.mubr.bf16.gmra.mrb[0].mxu0 %v1441
        %v1490 = vpop.f32.mrb[0].mxu0
        %v1491 = vadd.f32 0.0, %v1490
        %v1492 = vpop.f32.mrb[0].mxu0
        %v1493 = vadd.f32 0.0, %v1492
        %v1494 = vpop.f32.mrb[0].mxu0
        %v1495 = vadd.f32 0.0, %v1494
        %v1496 = vpop.f32.mrb[0].mxu0
        %v1497 = vadd.f32 0.0, %v1496
        %1498 = vmatprep.mubr.bf16.mxu0 0
        %1499 = vmatmul.mubr.bf16.gmra.mrb[0].mxu0 %v1444
        %v1500 = vpop.f32.mrb[0].mxu0
        %v1501 = vadd.f32 0.0, %v1500
        %v1502 = vpop.f32.mrb[0].mxu0
        %v1503 = vadd.f32 0.0, %v1502
        %v1504 = vpop.f32.mrb[0].mxu0
        %v1505 = vadd.f32 0.0, %v1504
        %v1506 = vpop.f32.mrb[0].mxu0
        %v1507 = vadd.f32 0.0, %v1506
        %1508 = vdwg.mxu0
        %v1509 = vmul.f32 %v1481, %v242
        %v1510 = vmul.f32 %v1483, %v243
        %v1511 = vmul.f32 %v1485, %v244
        %v1512 = vmul.f32 %v1487, %v245
        %v1513 = vmul.f32 %v1491, %v246
        %v1514 = vmul.f32 %v1493, %v247
        %v1515 = vmul.f32 %v1495, %v248
        %v1516 = vmul.f32 %v1497, %v249
        %v1517 = vmul.f32 %v1501, %v250
        %v1518 = vmul.f32 %v1503, %v251
        %v1519 = vmul.f32 %v1505, %v252
        %v1520 = vmul.f32 %v1507, %v253
        %v1521 = vadd.f32 %v1509, %v1511
        %v1522 = vadd.f32 %v1521, %v1513
        %v1523 = vadd.f32 %v1522, %v1515
        %v1524 = vadd.f32 %v1523, %v1517
        %v1525 = vadd.f32 %v1524, %v1519
        %v1526 = vrot.slane %v1525, 4
        %v1527 = vadd.f32 %v1525, %v1526
        %v1528 = vrot.slane %v1527, 2
        %v1529 = vadd.f32 %v1527, %v1528
        %v1530 = vrot.slane %v1529, 1
        %v1531 = vadd.f32 %v1529, %v1530
        %v1532 = vadd.f32 %v1510, %v1512
        %v1533 = vadd.f32 %v1532, %v1514
        %v1534 = vadd.f32 %v1533, %v1516
        %v1535 = vadd.f32 %v1534, %v1518
        %v1536 = vadd.f32 %v1535, %v1520
        %v1537 = vrot.slane %v1536, 4
        %v1538 = vadd.f32 %v1536, %v1537
        %v1539 = vrot.slane %v1538, 2
        %v1540 = vadd.f32 %v1538, %v1539
        %v1541 = vrot.slane %v1540, 1
        %v1542 = vadd.f32 %v1540, %v1541
        %v1543 = vmul.f32 %v1481, %v1481
        %v1544 = vmul.f32 %v1483, %v1483
        %v1545 = vmul.f32 %v1485, %v1485
        %v1546 = vmul.f32 %v1487, %v1487
        %v1547 = vmul.f32 %v1491, %v1491
        %v1548 = vmul.f32 %v1493, %v1493
        %v1549 = vmul.f32 %v1495, %v1495
        %v1550 = vmul.f32 %v1497, %v1497
        %v1551 = vmul.f32 %v1501, %v1501
        %v1552 = vmul.f32 %v1503, %v1503
        %v1553 = vmul.f32 %v1505, %v1505
        %v1554 = vmul.f32 %v1507, %v1507
        %v1555 = vadd.f32 %v1543, %v1545
        %v1556 = vadd.f32 %v1555, %v1547
        %v1557 = vadd.f32 %v1556, %v1549
        %v1558 = vadd.f32 %v1557, %v1551
        %v1559 = vadd.f32 %v1558, %v1553
        %v1560 = vrot.slane %v1559, 4
        %v1561 = vadd.f32 %v1559, %v1560
        %v1562 = vrot.slane %v1561, 2
        %v1563 = vadd.f32 %v1561, %v1562
        %v1564 = vrot.slane %v1563, 1
        %v1565 = vadd.f32 %v1563, %v1564
        %v1566 = vadd.f32 %v1544, %v1546
        %v1567 = vadd.f32 %v1566, %v1548
        %v1568 = vadd.f32 %v1567, %v1550
        %v1569 = vadd.f32 %v1568, %v1552
        %v1570 = vadd.f32 %v1569, %v1554
        %v1571 = vrot.slane %v1570, 4
        %v1572 = vadd.f32 %v1570, %v1571
        %v1573 = vrot.slane %v1572, 2
        %v1574 = vadd.f32 %v1572, %v1573
        %v1575 = vrot.slane %v1574, 1
        %v1576 = vadd.f32 %v1574, %v1575
        %v1577 = vadd.f32 %v1565, 1e-06
        %v1578 = vadd.f32 %v1576, 1e-06
        %v1579 = vrsqrt.pop %v1577
        %v1580 = vrsqrt.pop %v1578
        %v1581 = vmul.f32 %v1531, %v1579
        %v1582 = vmul.f32 %v1542, %v1580
        %v1585 = vcombine.low %v1581, %v1582
        %v1587 = vunpack.c.l.s4 1966171168
        %v1588 = vunpack.c.0.s8 %v1587
        %v1589 = vlaneseq
        %v1590 = vshrl.u32 %v1589, 7
        %v1591 = vsub.s32 %v1588, %v1590
        %v1592 = vrot.slane %v1585, %v1591
        %v1594 = vunpack.c.l.s4 1966171168
        %v1595 = vunpack.c.0.s8 %v1594
        %v1596 = vlaneseq
        %v1597 = vshrl.u32 %v1596, 7
        %v1598 = vsub.s32 %v1595, %v1597
        %v1599 = vrot.slane %v1592, %v1598
        %s1601 = scalar_lea.vmem %s226, 6 [#allocation3]
        %1602 = vst.msk [vmem:[%s1601] ss:$8 sm:$0x3] %vm473, %v1599
        %1603 = vst.msk [vmem:[%s1601] ss:$8 sm:$0x0] %vm473, %v1599
        %v1604 = vld [vmem:[%s232 + $0xa8] sm:$0xf]
        %v1605 = vld [vmem:[%s232 + $0xac] sm:$0xf]
        %v1606 = vld [vmem:[%s232 + $0xb0] sm:$0xf]
        %v1607 = vld [vmem:[%s232 + $0xb4] sm:$0xf]
        %v1608 = vld [vmem:[%s232 + $0xb8] sm:$0xf]
        %v1609 = vld [vmem:[%s232 + $0xbc] sm:$0xf]
        %v1616 = vunpack.c.l.b16 %v1604
        %v1617 = vunpack.c.l.b16 %v1605
        %v1618 = vunpack.c.l.b16 %v1606
        %v1619 = vunpack.c.l.b16 %v1607
        %v1620 = vunpack.c.l.b16 %v1608
        %v1621 = vunpack.c.l.b16 %v1609
        %v1622 = vpack.c.b16 %v1617, %v1616
        %v1623 = vpack.c.b16 %v1619, %v1618
        %v1624 = vpack.c.b16 %v1621, %v1620
        %v1626 = vsel %vm305, %v1622, 0
        %v1629 = vsel %vm305, %v1623, 0
        %v1632 = vsel %vm305, %v1624, 0
        %1634 = vmatprep.subr.bf16.mxu0 %v294
        %1635 = vmatpush1.bf16.msra.mxu0 %v293
        %1636 = vmatprep.subr.bf16.mxu0 %v296
        %1637 = vmatpush1.bf16.msra.mxu0 %v295
        %1638 = vmatprep.subr.bf16.mxu0 %v298
        %1639 = vmatpush1.bf16.msra.mxu0 %v297
        %1640 = vmatprep.subr.bf16.mxu0 0
        %1641 = vmatpush1.bf16.msra.mxu0 0
        %1642 = vmatprep.subr.bf16.mxu0 0
        %1643 = vmatpush1.bf16.msra.mxu0 0
        %1644 = vmatprep.subr.bf16.mxu0 0
        %1645 = vmatpush1.bf16.msra.mxu0 0
        %1646 = vmatprep.subr.bf16.mxu0 0
        %1647 = vmatpush1.bf16.msra.mxu0 0
        %1648 = vmatprep.subr.bf16.mxu0 0
        %1649 = vmatpush1.bf16.msra.mxu0 0
        %1650 = vmatprep.subr.bf16.mxu0 0
        %1651 = vmatpush1.bf16.msra.mxu0 0
        %1652 = vmatprep.subr.bf16.mxu0 0
        %1653 = vmatpush1.bf16.msra.mxu0 0
        %1654 = vmatprep.subr.bf16.mxu0 0
        %1655 = vmatpush1.bf16.msra.mxu0 0
        %1656 = vmatprep.subr.bf16.mxu0 0
        %1657 = vmatpush1.bf16.msra.mxu0 0
        %1658 = vmatprep.subr.bf16.mxu0 0
        %1659 = vmatpush1.bf16.msra.mxu0 0
        %1660 = vmatprep.subr.bf16.mxu0 0
        %1661 = vmatpush1.bf16.msra.mxu0 0
        %1662 = vmatprep.subr.bf16.mxu0 0
        %1663 = vmatpush1.bf16.msra.mxu0 0
        %1664 = vmatprep.subr.bf16.mxu0 0
        %1665 = vmatpush1.bf16.msra.mxu0 0
        %1666 = vmatprep.mubr.bf16.mxu0 0
        %1667 = vmatmul.mubr.bf16.gmra.mrb[0].mxu0 %v1626
        %v1668 = vpop.f32.mrb[0].mxu0
        %v1669 = vadd.f32 0.0, %v1668
        %v1670 = vpop.f32.mrb[0].mxu0
        %v1671 = vadd.f32 0.0, %v1670
        %v1672 = vpop.f32.mrb[0].mxu0
        %v1673 = vadd.f32 0.0, %v1672
        %v1674 = vpop.f32.mrb[0].mxu0
        %v1675 = vadd.f32 0.0, %v1674
        %1676 = vmatprep.mubr.bf16.mxu0 0
        %1677 = vmatmul.mubr.bf16.gmra.mrb[0].mxu0 %v1629
        %v1678 = vpop.f32.mrb[0].mxu0
        %v1679 = vadd.f32 0.0, %v1678
        %v1680 = vpop.f32.mrb[0].mxu0
        %v1681 = vadd.f32 0.0, %v1680
        %v1682 = vpop.f32.mrb[0].mxu0
        %v1683 = vadd.f32 0.0, %v1682
        %v1684 = vpop.f32.mrb[0].mxu0
        %v1685 = vadd.f32 0.0, %v1684
        %1686 = vmatprep.mubr.bf16.mxu0 0
        %1687 = vmatmul.mubr.bf16.gmra.mrb[0].mxu0 %v1632
        %v1688 = vpop.f32.mrb[0].mxu0
        %v1689 = vadd.f32 0.0, %v1688
        %v1690 = vpop.f32.mrb[0].mxu0
        %v1691 = vadd.f32 0.0, %v1690
        %v1692 = vpop.f32.mrb[0].mxu0
        %v1693 = vadd.f32 0.0, %v1692
        %v1694 = vpop.f32.mrb[0].mxu0
        %v1695 = vadd.f32 0.0, %v1694
        %1696 = vdwg.mxu0
        %v1697 = vmul.f32 %v1669, %v242
        %v1698 = vmul.f32 %v1671, %v243
        %v1699 = vmul.f32 %v1673, %v244
        %v1700 = vmul.f32 %v1675, %v245
        %v1701 = vmul.f32 %v1679, %v246
        %v1702 = vmul.f32 %v1681, %v247
        %v1703 = vmul.f32 %v1683, %v248
        %v1704 = vmul.f32 %v1685, %v249
        %v1705 = vmul.f32 %v1689, %v250
        %v1706 = vmul.f32 %v1691, %v251
        %v1707 = vmul.f32 %v1693, %v252
        %v1708 = vmul.f32 %v1695, %v253
        %v1709 = vadd.f32 %v1697, %v1699
        %v1710 = vadd.f32 %v1709, %v1701
        %v1711 = vadd.f32 %v1710, %v1703
        %v1712 = vadd.f32 %v1711, %v1705
        %v1713 = vadd.f32 %v1712, %v1707
        %v1714 = vrot.slane %v1713, 4
        %v1715 = vadd.f32 %v1713, %v1714
        %v1716 = vrot.slane %v1715, 2
        %v1717 = vadd.f32 %v1715, %v1716
        %v1718 = vrot.slane %v1717, 1
        %v1719 = vadd.f32 %v1717, %v1718
        %v1720 = vadd.f32 %v1698, %v1700
        %v1721 = vadd.f32 %v1720, %v1702
        %v1722 = vadd.f32 %v1721, %v1704
        %v1723 = vadd.f32 %v1722, %v1706
        %v1724 = vadd.f32 %v1723, %v1708
        %v1725 = vrot.slane %v1724, 4
        %v1726 = vadd.f32 %v1724, %v1725
        %v1727 = vrot.slane %v1726, 2
        %v1728 = vadd.f32 %v1726, %v1727
        %v1729 = vrot.slane %v1728, 1
        %v1730 = vadd.f32 %v1728, %v1729
        %v1731 = vmul.f32 %v1669, %v1669
        %v1732 = vmul.f32 %v1671, %v1671
        %v1733 = vmul.f32 %v1673, %v1673
        %v1734 = vmul.f32 %v1675, %v1675
        %v1735 = vmul.f32 %v1679, %v1679
        %v1736 = vmul.f32 %v1681, %v1681
        %v1737 = vmul.f32 %v1683, %v1683
        %v1738 = vmul.f32 %v1685, %v1685
        %v1739 = vmul.f32 %v1689, %v1689
        %v1740 = vmul.f32 %v1691, %v1691
        %v1741 = vmul.f32 %v1693, %v1693
        %v1742 = vmul.f32 %v1695, %v1695
        %v1743 = vadd.f32 %v1731, %v1733
        %v1744 = vadd.f32 %v1743, %v1735
        %v1745 = vadd.f32 %v1744, %v1737
        %v1746 = vadd.f32 %v1745, %v1739
        %v1747 = vadd.f32 %v1746, %v1741
        %v1748 = vrot.slane %v1747, 4
        %v1749 = vadd.f32 %v1747, %v1748
        %v1750 = vrot.slane %v1749, 2
        %v1751 = vadd.f32 %v1749, %v1750
        %v1752 = vrot.slane %v1751, 1
        %v1753 = vadd.f32 %v1751, %v1752
        %v1754 = vadd.f32 %v1732, %v1734
        %v1755 = vadd.f32 %v1754, %v1736
        %v1756 = vadd.f32 %v1755, %v1738
        %v1757 = vadd.f32 %v1756, %v1740
        %v1758 = vadd.f32 %v1757, %v1742
        %v1759 = vrot.slane %v1758, 4
        %v1760 = vadd.f32 %v1758, %v1759
        %v1761 = vrot.slane %v1760, 2
        %v1762 = vadd.f32 %v1760, %v1761
        %v1763 = vrot.slane %v1762, 1
        %v1764 = vadd.f32 %v1762, %v1763
        %v1765 = vadd.f32 %v1753, 1e-06
        %v1766 = vadd.f32 %v1764, 1e-06
        %v1767 = vrsqrt.pop %v1765
        %v1768 = vrsqrt.pop %v1766
        %v1769 = vmul.f32 %v1719, %v1767
        %v1770 = vmul.f32 %v1730, %v1768
        %v1773 = vcombine.low %v1769, %v1770
        %v1775 = vunpack.c.l.s4 1966171168
        %v1776 = vunpack.c.0.s8 %v1775
        %v1777 = vlaneseq
        %v1778 = vshrl.u32 %v1777, 7
        %v1779 = vsub.s32 %v1776, %v1778
        %v1780 = vrot.slane %v1773, %v1779
        %v1782 = vunpack.c.l.s4 1966171168
        %v1783 = vunpack.c.0.s8 %v1782
        %v1784 = vlaneseq
        %v1785 = vshrl.u32 %v1784, 7
        %v1786 = vsub.s32 %v1783, %v1785
        %v1787 = vrot.slane %v1780, %v1786
        %s1789 = scalar_lea.vmem %s226, 7 [#allocation3]
        %1790 = vst.msk [vmem:[%s1789] ss:$8 sm:$0x3] %vm473, %v1787
        %1791 = vst.msk [vmem:[%s1789] ss:$8 sm:$0x0] %vm473, %v1787
        %s1792 = sand.u32 %s90, 1
        %s1793 = scalar_lea.sflag [#allocation4], %s1792
        %s1794 = sand.u32 %s90, 1
        %s1795 = smul.addr %s1794, 16
        %s1796 = scalar_lea.vmem [#allocation3], %s1795
        // Predicated region
        $region67: #{tpu_custom_call.1} parent=61 // pred_check
          %p1797 = pneg %p100
        $region68: #{tpu_custom_call.1} parent=61 // pred_check_branch
          %1799 = sbr.rel (%p1797) target = $region70
        $region69: #{tpu_custom_call.1} parent=61 // pred_region
          %s1800 = smul.u32 2, %s21
          %s1802 = ssub.s32 256, 256
          %1803 = vsyncadd %s1793, %s1802
          %s1804 = smul.addr %s20, 4
          %s1805 = sadd.s32 %s1800, %s1804
          %s1806 = smul.addr %s1805, 128
          %s1807 = scalar_lea.hbm %s2, %s1806
          %s1809 = sshll.u32 %s1796, 4
          %s1810 = int_to_ptr.vmem [resolvable:$true] %s1809
          %1812 = dma.vmem_to_hbm [thread:$0]  %s1810, 256, %s1807, %s1793
        $region70: #{tpu_custom_call.1} parent=61 // pred_fallthru
          _
      $region62: #{tpu_custom_call.1} parent=5 // pred_fallthru
        _
      %p1813 = scmp.le.s32.totalorder 2, %s11
      // Predicated region
      $region71: #{tpu_custom_call.1} parent=5 // pred_check
        %p1814 = pneg %p1813
      $region72: #{tpu_custom_call.1} parent=5 // pred_check_branch
        %1816 = sbr.rel (%p1814) target = $region74
      $region73: #{tpu_custom_call.1} parent=5 // pred_region
        %s1817 = ssub.s32 %s11, 2
        // Predicated region
        $region75: #{tpu_custom_call.1} parent=73 // pred_check
          %p1818 = pneg %p106
        $region76: #{tpu_custom_call.1} parent=73 // pred_check_branch
          %1820 = sbr.rel (%p1818) target = $region78
        $region77: #{tpu_custom_call.1} parent=73 // pred_region
          %s1821 = sand.u32 %s91, 1
          %s1822 = scalar_lea.sflag [#allocation4], %s1821
          %s1823 = sand.u32 %s91, 1
          %s1824 = smul.addr %s1823, 16
          %s1825 = scalar_lea.vmem [#allocation3], %s1824
          %1826 = dma.done %s1822, 256
        $region78: #{tpu_custom_call.1} parent=73 // pred_fallthru
          _
      $region74: #{tpu_custom_call.1} parent=5 // pred_fallthru
        _
    $region6: #{tpu_custom_call.1} parent=1 // loop_footer
      %s15 = sadd.s32 1, %s11
    $region7: #{tpu_custom_call.1} parent=1 // loop_footer_branch
      %10 = sbr.rel target = $region3
    $region8: #{tpu_custom_call.1} parent=1 // loop_exit
      _
    %1827 = vsyncpa [#allocation4], 1
    %s1828 = scalar_lea.sflag [#allocation4], 1
    %1829 = vsyncpa %s1828, 1

</llo_original>
